<compile_context>
chip_gen: v7x
topology: tpu7x:2x2x1
jax: 0.10.0
libtpu: 0.0.40
codegen_flags: <defaults>
</compile_context>

<pallas_src>
import functools
from math import sqrt

import jax
import jax.numpy as jnp
from jax import lax
from jax.experimental import pallas as pl
from jax.experimental.pallas import tpu as pltpu


# ----------------------------------------------------------------------------
# Fused kernel: grid = (r,), reduction over relations into the resident output
# ----------------------------------------------------------------------------
def _rgcn_fused_kernel(hor_ref, ver_ref, w1_ref, w2_ref, b1_ref, b2_ref,
                       out_ref, h_ref, *, softmax: bool, numcls: int):
    p = pl.program_id(0)
    cdt = h_ref.dtype  # compute dtype (bf16 by default)

    # ---- layer 1 (once): h = relu(hor @ W1_flat + b1), single K = r*n matmul
    @pl.when(p == 0)
    def _():
        h = jnp.dot(hor_ref[...], w1_ref[...],
                    preferred_element_type=jnp.float32)
        h = jnp.maximum(h + b1_ref[...], 0.0)
        h_ref[...] = h.astype(cdt)
        out_ref[...] = jnp.zeros_like(out_ref)

    # ---- layer 2, reassociated: out += ver_p @ (h @ W2[p])
    hw2 = jnp.dot(h_ref[...], w2_ref[p], preferred_element_type=jnp.float32)
    out_ref[...] += jnp.dot(ver_ref[...], hw2.astype(cdt),
                            preferred_element_type=jnp.float32)

    # ---- epilogue: bias2 (+ optional masked softmax over the real classes)
    @pl.when(p == pl.num_programs(0) - 1)
    def _():
        logits = out_ref[...] + b2_ref[...]
        if softmax:
            if logits.shape[-1] > numcls:          # mask padded class lanes
                lane = lax.broadcasted_iota(jnp.int32, logits.shape, 1)
                logits = jnp.where(lane < numcls, logits, -jnp.inf)
            m = jnp.max(logits, axis=-1, keepdims=True)
            ex = jnp.exp(logits - m)
            logits = ex * pl.reciprocal(jnp.sum(ex, axis=-1, keepdims=True),
                                        approx=True)
        out_ref[...] = logits


# ----------------------------------------------------------------------------
# Wrapper: RGCNClassic.forward()
# ----------------------------------------------------------------------------
def rgcn_classic_forward(hor_graph, ver_graph, weights1, weights2,
                         bias1, bias2, *, softmax=False,
                         compute_dtype=jnp.bfloat16):
    n, rn = hor_graph.shape
    r = rn // n
    e = weights1.shape[-1]
    c = weights2.shape[-1]
    f32 = jnp.float32
    assert n % 8 == 0, "toy wrapper assumes n is a multiple of 8"

    LANE = 128
    e_pad = ((e + LANE - 1) // LANE) * LANE
    c_pad = ((c + LANE - 1) // LANE) * LANE

    # Flatten W1 so layer 1 is one K = r*n matmul; zero-pad lane dims to 128.
    w1_flat = jnp.pad(weights1.reshape(r * n, e),
                      ((0, 0), (0, e_pad - e))).astype(compute_dtype)
    w2_pad = jnp.pad(weights2,
                     ((0, 0), (0, e_pad - e), (0, c_pad - c))).astype(compute_dtype)
    b1_pad = jnp.pad(bias1.reshape(1, e), ((0, 0), (0, e_pad - e))).astype(f32)
    b2_pad = jnp.pad(bias2.reshape(1, c), ((0, 0), (0, c_pad - c))).astype(f32)
    hor = hor_graph.astype(compute_dtype)
    ver = ver_graph.astype(compute_dtype)

    out_pad = pl.pallas_call(
        functools.partial(_rgcn_fused_kernel, softmax=softmax, numcls=c),
        out_shape=jax.ShapeDtypeStruct((n, c_pad), f32),
        grid_spec=pltpu.PrefetchScalarGridSpec(
            num_scalar_prefetch=0,
            grid=(r,),
            in_specs=[
                pl.BlockSpec((n, r * n), lambda p: (0, 0)),        # hor (resident)
                pl.BlockSpec((n, n), lambda p: (p, 0)),            # ver block for rel p
                pl.BlockSpec((r * n, e_pad), lambda p: (0, 0)),    # W1 flat (resident)
                pl.BlockSpec((r, e_pad, c_pad), lambda p: (0, 0, 0)),  # W2 full (resident)
                pl.BlockSpec((1, e_pad), lambda p: (0, 0)),        # bias1
                pl.BlockSpec((1, c_pad), lambda p: (0, 0)),        # bias2
            ],
            out_specs=pl.BlockSpec((n, c_pad), lambda p: (0, 0)),  # resident accumulator
            scratch_shapes=[pltpu.VMEM((n, e_pad), compute_dtype)],  # hidden h
        ),
        compiler_params=pltpu.CompilerParams(
            dimension_semantics=("arbitrary",)),  # r is a reduction axis
        # NOTE: when scaling n, raise vmem_limit_bytes here (v5e/v6e) and add
        # an M "parallel" grid axis (v7x).
    )(hor, ver, w1_flat, w2_pad, b1_pad, b2_pad)

    return out_pad[:, :c]


# ----------------------------------------------------------------------------
# Pure-JAX reference (mirrors the torch forward exactly, f32 throughout)
# ----------------------------------------------------------------------------
def rgcn_classic_reference(hor_graph, ver_graph, weights1, weights2,
                           bias1, bias2, *, softmax=False):
    n, rn = hor_graph.shape
    r = rn // n
    e = weights1.shape[-1]
    c = weights2.shape[-1]
    h = hor_graph @ weights1.reshape(r * n, e)
    h = jax.nn.relu(h + bias1.reshape(e))
    h = (ver_graph @ h).reshape(r, n, e)
    h = jnp.einsum("rne,rec->nc", h, weights2)
    h = h + bias2.reshape(c)
    return jax.nn.softmax(h, axis=1) if softmax else h


# ----------------------------------------------------------------------------
# Deterministic synthetic graph + parameter construction
# ----------------------------------------------------------------------------
def _xavier_uniform(key, shape, gain):
    # PyTorch fan for 3D (d0, d1, d2): fan_in = d1*d2, fan_out = d0*d2
    fan_in = shape[1] * shape[2]
    fan_out = shape[0] * shape[2]
    bound = gain * sqrt(6.0 / (fan_in + fan_out))
    return jax.random.uniform(key, shape, jnp.float32, -bound, bound)


def build_inputs(key, n, r, emb, numcls, edge_prob=0.05):
    keys = jax.random.split(key, 5)

    # Per-relation binary adjacency, last relation holds self-loops.
    adj = jax.random.bernoulli(keys[0], edge_prob, (r, n, n)).astype(jnp.float32)
    adj = adj.at[r - 1].set(jnp.eye(n, dtype=jnp.float32))

    # Row-normalize each relation block (matches util.sum_sparse over the
    # vertically stacked graph; values shared by hor & ver graphs).
    deg = jnp.sum(adj, axis=-1, keepdims=True)
    norm = jnp.where(deg > 0, adj / jnp.maximum(deg, 1.0), 0.0)

    ver_graph = norm.reshape(r * n, n)                            # (r*n, n)
    hor_graph = jnp.transpose(norm, (1, 0, 2)).reshape(n, r * n)  # (n, r*n)

    gain = sqrt(2.0)  # calculate_gain('relu')
    weights1 = _xavier_uniform(keys[1], (r, n, emb), gain)
    weights2 = _xavier_uniform(keys[2], (r, emb, numcls), gain)
    # The module initializes biases to zero; use small nonzero ones here so the
    # bias path of the kernel is actually exercised by the check.
    bias1 = 0.01 * jax.random.normal(keys[3], (emb,), jnp.float32)
    bias2 = 0.01 * jax.random.normal(keys[4], (numcls,), jnp.float32)

    return hor_graph, ver_graph, weights1, weights2, bias1, bias2


def _rel_err(a, b):
    return float(jnp.linalg.norm(a - b) / (jnp.linalg.norm(b) + 1e-12))


if __name__ == "__main__":
    n, r, emb, numcls = 128, 4, 32, 16

    key = jax.random.PRNGKey(0)
    hor_graph, ver_graph, w1, w2, b1, b2 = build_inputs(key, n, r, emb, numcls)

    # --- logits path (bf16 compute, f32 accumulate) ------------------------
    out = rgcn_classic_forward(hor_graph, ver_graph, w1, w2, b1, b2,
                               softmax=False)
    out = jax.block_until_ready(out)
    ref = rgcn_classic_reference(hor_graph, ver_graph, w1, w2, b1, b2,
                                 softmax=False)
    assert out.shape == (n, numcls)
    assert _rel_err(out, ref) < 2e-2, f"logits rel err {_rel_err(out, ref)}"

    # --- softmax path -------------------------------------------------------
    out_sm = rgcn_classic_forward(hor_graph, ver_graph, w1, w2, b1, b2,
                                  softmax=True)
    out_sm = jax.block_until_ready(out_sm)
    ref_sm = rgcn_classic_reference(hor_graph, ver_graph, w1, w2, b1, b2,
                                    softmax=True)
    assert out_sm.shape == (n, numcls)
    assert _rel_err(out_sm, ref_sm) < 2e-2, f"softmax rel err {_rel_err(out_sm, ref_sm)}"

    print("KERNEL_OK")
</pallas_src>

<mosaic_0001>
module attributes {stable_mosaic.version = 11 : i64} {
  func.func @_rgcn_fused_kernel(%arg0: i32, %arg1: memref<128x512xbf16, #tpu.memory_space<vmem>>, %arg2: memref<128x128xbf16, #tpu.memory_space<vmem>>, %arg3: memref<512x128xbf16, #tpu.memory_space<vmem>>, %arg4: memref<4x128x128xbf16, #tpu.memory_space<vmem>>, %arg5: memref<1x128xf32, #tpu.memory_space<vmem>>, %arg6: memref<1x128xf32, #tpu.memory_space<vmem>>, %arg7: memref<128x128xf32, #tpu.memory_space<vmem>>, %arg8: memref<128x128xbf16, #tpu.memory_space<vmem>>) attributes {dimension_semantics = [#tpu.dimension_semantics<arbitrary>], iteration_bounds = array<i64: 4>, scalar_prefetch = 0 : i64, scratch_operands = 1 : i64, tpu.core_type = #tpu.core_type<tc>, window_params = [{pipeline_mode = #tpu.pipeline_mode<synchronous>, transform_indices = @transform_0, window_bounds = array<i64: 128, 512>}, {transform_indices = @transform_1, window_bounds = array<i64: 128, 128>}, {pipeline_mode = #tpu.pipeline_mode<synchronous>, transform_indices = @transform_2, window_bounds = array<i64: 512, 128>}, {pipeline_mode = #tpu.pipeline_mode<synchronous>, transform_indices = @transform_3, window_bounds = array<i64: 4, 128, 128>}, {pipeline_mode = #tpu.pipeline_mode<synchronous>, transform_indices = @transform_4, window_bounds = array<i64: 1, 128>}, {pipeline_mode = #tpu.pipeline_mode<synchronous>, transform_indices = @transform_5, window_bounds = array<i64: 1, 128>}, {pipeline_mode = #tpu.pipeline_mode<synchronous>, transform_indices = @transform_6, window_bounds = array<i64: 128, 128>}]} {
    %c0_i32 = arith.constant 0 : i32
    %0 = arith.cmpi eq, %arg0, %c0_i32 : i32
    %1 = arith.extui %0 : i1 to i32
    %c0_i32_0 = arith.constant 0 : i32
    %2 = arith.cmpi ne, %1, %c0_i32_0 : i32
    scf.if %2 {
      %c0_12 = arith.constant 0 : index
      %c0_13 = arith.constant 0 : index
      %17 = vector.load %arg1[%c0_12, %c0_13] : memref<128x512xbf16, #tpu.memory_space<vmem>>, vector<128x512xbf16>
      %c0_14 = arith.constant 0 : index
      %c0_15 = arith.constant 0 : index
      %18 = vector.load %arg3[%c0_14, %c0_15] : memref<512x128xbf16, #tpu.memory_space<vmem>>, vector<512x128xbf16>
      %cst_16 = arith.constant dense<0.000000e+00> : vector<128x128xf32>
      %19 = tpu.matmul %17, %18, %cst_16 {dimension_numbers = #tpu.dot_dimension_numbers<[1], [0], [0], [1], [0, 0, 1, 1], [], []>} : vector<128x512xbf16>, vector<512x128xbf16>, vector<128x128xf32> -> vector<128x128xf32>
      %c0_17 = arith.constant 0 : index
      %c0_18 = arith.constant 0 : index
      %20 = vector.load %arg5[%c0_17, %c0_18] : memref<1x128xf32, #tpu.memory_space<vmem>>, vector<1x128xf32>
      %21 = vector.broadcast %20 : vector<1x128xf32> to vector<128x128xf32>
      %22 = arith.addf %19, %21 : vector<128x128xf32>
      %cst_19 = arith.constant 0.000000e+00 : f32
      %23 = vector.broadcast %cst_19 : f32 to vector<128x128xf32>
      %24 = arith.maximumf %22, %23 : vector<128x128xf32>
      %25 = arith.truncf %24 : vector<128x128xf32> to vector<128x128xbf16>
      %c0_20 = arith.constant 0 : index
      %c0_21 = arith.constant 0 : index
      %26 = vector.load %arg8[%c0_20, %c0_21] : memref<128x128xbf16, #tpu.memory_space<vmem>>, vector<128x128xbf16>
      tpu.vector_store %arg8[%c0_20, %c0_21], %25 {strides = array<i32>} : memref<128x128xbf16, #tpu.memory_space<vmem>>, vector<128x128xbf16>,
      %cst_22 = arith.constant 0.000000e+00 : f32
      %27 = vector.broadcast %cst_22 : f32 to vector<128x128xf32>
      %c0_23 = arith.constant 0 : index
      %c0_24 = arith.constant 0 : index
      %28 = vector.load %arg7[%c0_23, %c0_24] : memref<128x128xf32, #tpu.memory_space<vmem>>, vector<128x128xf32>
      tpu.vector_store %arg7[%c0_23, %c0_24], %27 {strides = array<i32>} : memref<128x128xf32, #tpu.memory_space<vmem>>, vector<128x128xf32>,
    } else {
    }
    %c0 = arith.constant 0 : index
    %c0_1 = arith.constant 0 : index
    %3 = vector.load %arg8[%c0, %c0_1] : memref<128x128xbf16, #tpu.memory_space<vmem>>, vector<128x128xbf16>
    %4 = arith.index_cast %arg0 : i32 to index
    %c0_2 = arith.constant 0 : index
    %c0_3 = arith.constant 0 : index
    %5 = vector.load %arg4[%4, %c0_2, %c0_3] : memref<4x128x128xbf16, #tpu.memory_space<vmem>>, vector<1x128x128xbf16>
    %6 = vector.shape_cast %5 : vector<1x128x128xbf16> to vector<128x128xbf16>
    %cst = arith.constant dense<0.000000e+00> : vector<128x128xf32>
    %7 = tpu.matmul %3, %6, %cst {dimension_numbers = #tpu.dot_dimension_numbers<[1], [0], [0], [1], [0, 0, 1, 1], [], []>} : vector<128x128xbf16>, vector<128x128xbf16>, vector<128x128xf32> -> vector<128x128xf32>
    %c0_4 = arith.constant 0 : index
    %c0_5 = arith.constant 0 : index
    %8 = vector.load %arg7[%c0_4, %c0_5] : memref<128x128xf32, #tpu.memory_space<vmem>>, vector<128x128xf32>
    %c0_6 = arith.constant 0 : index
    %c0_7 = arith.constant 0 : index
    %9 = vector.load %arg2[%c0_6, %c0_7] : memref<128x128xbf16, #tpu.memory_space<vmem>>, vector<128x128xbf16>
    %10 = arith.truncf %7 : vector<128x128xf32> to vector<128x128xbf16>
    %cst_8 = arith.constant dense<0.000000e+00> : vector<128x128xf32>
    %11 = tpu.matmul %9, %10, %cst_8 {dimension_numbers = #tpu.dot_dimension_numbers<[1], [0], [0], [1], [0, 0, 1, 1], [], []>} : vector<128x128xbf16>, vector<128x128xbf16>, vector<128x128xf32> -> vector<128x128xf32>
    %12 = arith.addf %8, %11 : vector<128x128xf32>
    %c0_9 = arith.constant 0 : index
    %c0_10 = arith.constant 0 : index
    %13 = vector.load %arg7[%c0_9, %c0_10] : memref<128x128xf32, #tpu.memory_space<vmem>>, vector<128x128xf32>
    tpu.vector_store %arg7[%c0_9, %c0_10], %12 {strides = array<i32>} : memref<128x128xf32, #tpu.memory_space<vmem>>, vector<128x128xf32>,
    %c3_i32 = arith.constant 3 : i32
    %14 = arith.cmpi eq, %arg0, %c3_i32 : i32
    %15 = arith.extui %14 : i1 to i32
    %c0_i32_11 = arith.constant 0 : i32
    %16 = arith.cmpi ne, %15, %c0_i32_11 : i32
    scf.if %16 {
      %c0_12 = arith.constant 0 : index
      %c0_13 = arith.constant 0 : index
      %17 = vector.load %arg7[%c0_12, %c0_13] : memref<128x128xf32, #tpu.memory_space<vmem>>, vector<128x128xf32>
      %c0_14 = arith.constant 0 : index
      %c0_15 = arith.constant 0 : index
      %18 = vector.load %arg6[%c0_14, %c0_15] : memref<1x128xf32, #tpu.memory_space<vmem>>, vector<1x128xf32>
      %19 = vector.broadcast %18 : vector<1x128xf32> to vector<128x128xf32>
      %20 = arith.addf %17, %19 : vector<128x128xf32>
      %c0_16 = arith.constant 0 : index
      %c0_17 = arith.constant 0 : index
      %21 = vector.load %arg7[%c0_16, %c0_17] : memref<128x128xf32, #tpu.memory_space<vmem>>, vector<128x128xf32>
      tpu.vector_store %arg7[%c0_16, %c0_17], %20 {strides = array<i32>} : memref<128x128xf32, #tpu.memory_space<vmem>>, vector<128x128xf32>,
    } else {
    }
    return
  }
  func.func @transform_0(%arg0: i32) -> (i32, i32) {
    %c0_i32 = arith.constant 0 : i32
    %c0_i32_0 = arith.constant 0 : i32
    %c0_i32_1 = arith.constant 0 : i32
    return %c0_i32, %c0_i32_0 : i32, i32
  }
  func.func @transform_1(%arg0: i32) -> (i32, i32) {
    %c0_i32 = arith.constant 0 : i32
    %c0_i32_0 = arith.constant 0 : i32
    return %arg0, %c0_i32 : i32, i32
  }
  func.func @transform_2(%arg0: i32) -> (i32, i32) {
    %c0_i32 = arith.constant 0 : i32
    %c0_i32_0 = arith.constant 0 : i32
    %c0_i32_1 = arith.constant 0 : i32
    return %c0_i32, %c0_i32_0 : i32, i32
  }
  func.func @transform_3(%arg0: i32) -> (i32, i32, i32) {
    %c0_i32 = arith.constant 0 : i32
    %c0_i32_0 = arith.constant 0 : i32
    %c0_i32_1 = arith.constant 0 : i32
    %c0_i32_2 = arith.constant 0 : i32
    return %c0_i32, %c0_i32_0, %c0_i32_1 : i32, i32, i32
  }
  func.func @transform_4(%arg0: i32) -> (i32, i32) {
    %c0_i32 = arith.constant 0 : i32
    %c0_i32_0 = arith.constant 0 : i32
    %c0_i32_1 = arith.constant 0 : i32
    return %c0_i32, %c0_i32_0 : i32, i32
  }
  func.func @transform_5(%arg0: i32) -> (i32, i32) {
    %c0_i32 = arith.constant 0 : i32
    %c0_i32_0 = arith.constant 0 : i32
    %c0_i32_1 = arith.constant 0 : i32
    return %c0_i32, %c0_i32_0 : i32, i32
  }
  func.func @transform_6(%arg0: i32) -> (i32, i32) {
    %c0_i32 = arith.constant 0 : i32
    %c0_i32_0 = arith.constant 0 : i32
    %c0_i32_1 = arith.constant 0 : i32
    return %c0_i32, %c0_i32_0 : i32, i32
  }
}

</mosaic_0001>

<llo_original>
// kernel: tpu_custom_call.1
$region0: #{tpu_custom_call.1}
  #allocation0 [shape = 'u32[]', space=smem, size = 0x4, offset = 0x4, fixed_abs, tag = 'smem constant byte address 0x4 - core index']
  #allocation1 [shape = 'u32[144,128]{1,0:T(1,128)}', space=vmem, size = 0x12000, scoped, tag = 'internal scratch']
  #allocation2 [shape = 'bf16[128,128]{1,0:T(16,128)(2,1)}', space=vmem, size = 0x8000, scoped, tag = 'scratch operand']
  %s0 = inlined_call_operand.hbm [shape: bf16[128,512], index: 0, kind: input, shape index: {}]
  %s1 = inlined_call_operand.hbm [shape: bf16[512,128], index: 1, kind: input, shape index: {}]
  %s2 = inlined_call_operand.hbm [shape: bf16[512,128], index: 2, kind: input, shape index: {}]
  %s3 = inlined_call_operand.hbm [shape: bf16[4,128,128], index: 3, kind: input, shape index: {}]
  %s4 = inlined_call_operand.vmem [shape: f32[1,128], index: 4, kind: input, shape index: {}]
  %s5 = inlined_call_operand.vmem [shape: f32[1,128], index: 5, kind: input, shape index: {}]
  %s6 = inlined_call_operand.hbm [shape: f32[128,128], index: 6, kind: output, shape index: {}]
  %s7 = sld [smem:[#allocation0]]
  $region81: #{tpu_custom_call.1} parent=0
    _
  %s9 = ssub.s32 1, %s7
  %s10 = scalar_select 0, %s9, %s7
  $region1: #{tpu_custom_call.1} parent=0
    #allocation3 [shape = 'u8[131072]{0}', space=vmem, size = 0x20000, scoped, tag = 'input window, operand 0, single buffered']
    #allocation4 [shape = 's32[2]{0}', space=sflag, size = 0x8, scoped, tag = 'scoped memory for tpu_custom_call.1']
    #allocation5 [shape = 's32[2]{0}', space=sflag, size = 0x8, scoped, tag = 'scoped memory for tpu_custom_call.1']
    #allocation6 [shape = 'u8[65536]{0}', space=vmem, size = 0x10000, scoped, tag = 'input window, operand 1']
    #allocation7 [shape = 's32[2]{0}', space=sflag, size = 0x8, scoped, tag = 'scoped memory for tpu_custom_call.1']
    #allocation8 [shape = 'u8[131072]{0}', space=vmem, size = 0x20000, scoped, tag = 'input window, operand 2, single buffered']
    #allocation9 [shape = 'u8[131072]{0}', space=vmem, size = 0x20000, scoped, tag = 'input window, operand 3, single buffered']
    #allocation10 [shape = 's32[1]{0}', space=sflag, size = 0x4, scoped, tag = 'scoped memory for tpu_custom_call.1']
    #allocation11 [shape = 'u8[65536]{0}', space=vmem, size = 0x10000, scoped, tag = 'output window, operand 0, single buffered']
    %11 = vsyncpa [#allocation4], 0
    %12 = vsyncpa [#allocation7], 0
    %s13 = scalar_lea.sflag [#allocation7], 1
    %14 = vsyncpa %s13, 0
    %15 = vsyncpa [#allocation10], 0
    %16 = vsyncpa [#allocation5], 0
    loop: start=0, step=1, limit=6
    $region2: #{tpu_custom_call.1} parent=1 // loop_pre_header
      _
    $region3: #{tpu_custom_call.1} parent=1 // loop_header
      %s18 = sphi 0, %s22
      %p19 = scmp.ge.s32.totalorder %s18, 6
      %s26 = sphi 0, %s26
      %s28 = sphi 0, %s26
      %s29 = sphi 0, %s28
      %s43 = sphi 0, %s29
      %s49 = sphi 0, %s51
      %s52 = sphi 0, %s49
      %s53 = sphi 0, %s52
      %s69 = sphi 0, %s53
      %s73 = sphi 0, %s73
      %s75 = sphi 0, %s73
      %s76 = sphi 0, %s75
      %s90 = sphi 0, %s76
      %s94 = sphi 0, %s94
      %s96 = sphi 0, %s94
      %s97 = sphi 0, %s96
      %s111 = sphi 0, %s97
      %s115 = sphi 0, %s115
      %s117 = sphi 0, %s115
      %s118 = sphi 0, %s117
      %s132 = sphi 0, %s118
      %s136 = sphi 0, %s136
      %s138 = sphi 0, %s136
      %s139 = sphi 0, %s138
      %s153 = sphi 0, %s139
      %s157 = sphi 0, %s157
      %s159 = sphi 0, %s157
      %s160 = sphi 0, %s159
      %s174 = sphi 0, %s160
    $region4: #{tpu_custom_call.1} parent=1 // loop_header_branch
      %21 = sbr.rel (%p19) target = $region8
    $region5: #{tpu_custom_call.1} parent=1 // loop_body
      %s23 = ssub.s32 %s18, 1
      %s24 = ssub.s32 %s18, 2
      %s25 = sadd.s32 %s18, 1
      %s27 = sadd.s32 %s26, 1
      %p30 = scmp.eq.s32.totalorder %s18, 3
      %p31 = scmp.ne.s32.totalorder %s26, %s28
      %p32 = scmp.eq.s32.totalorder %s18, 0
      %p33 = por %p31, %p32
      %p34 = scmp.ne.s32.totalorder %s26, %s28
      %p35 = scmp.eq.s32.totalorder %s23, 3
      %p36 = por %p34, %p35
      %p37 = scmp.ne.s32.totalorder %s28, %s29
      %p38 = scmp.eq.s32.totalorder %s23, 0
      %p39 = por %p37, %p38
      %p40 = scmp.ne.s32.totalorder %s28, %s29
      %p41 = scmp.eq.s32.totalorder %s24, 3
      %p42 = por %p40, %p41
      %p44 = scmp.ne.s32.totalorder %s29, %s43
      %p45 = scmp.eq.s32.totalorder %s24, 0
      %p46 = por %p44, %p45
      %s47 = ssub.s32 %s18, %s25
      %p48 = scmp.eq.s32.totalorder %s47, 0
      %s50 = sadd.s32 %s49, 1
      %s51 = scalar_select %p48, %s49, %s50
      %p54 = pneg %p48
      %p55 = scmp.eq.s32.totalorder %s18, 3
      %p56 = por %p54, %p55
      %p57 = scmp.ne.s32.totalorder %s49, %s52
      %p58 = scmp.eq.s32.totalorder %s18, 0
      %p59 = por %p57, %p58
      %p60 = scmp.ne.s32.totalorder %s49, %s52
      %p61 = scmp.eq.s32.totalorder %s23, 3
      %p62 = por %p60, %p61
      %p63 = scmp.ne.s32.totalorder %s52, %s53
      %p64 = scmp.eq.s32.totalorder %s23, 0
      %p65 = por %p63, %p64
      %p66 = scmp.ne.s32.totalorder %s52, %s53
      %p67 = scmp.eq.s32.totalorder %s24, 3
      %p68 = por %p66, %p67
      %p70 = scmp.ne.s32.totalorder %s53, %s69
      %p71 = scmp.eq.s32.totalorder %s24, 0
      %p72 = por %p70, %p71
      %s74 = sadd.s32 %s73, 1
      %p77 = scmp.eq.s32.totalorder %s18, 3
      %p78 = scmp.ne.s32.totalorder %s73, %s75
      %p79 = scmp.eq.s32.totalorder %s18, 0
      %p80 = por %p78, %p79
      %p81 = scmp.ne.s32.totalorder %s73, %s75
      %p82 = scmp.eq.s32.totalorder %s23, 3
      %p83 = por %p81, %p82
      %p84 = scmp.ne.s32.totalorder %s75, %s76
      %p85 = scmp.eq.s32.totalorder %s23, 0
      %p86 = por %p84, %p85
      %p87 = scmp.ne.s32.totalorder %s75, %s76
      %p88 = scmp.eq.s32.totalorder %s24, 3
      %p89 = por %p87, %p88
      %p91 = scmp.ne.s32.totalorder %s76, %s90
      %p92 = scmp.eq.s32.totalorder %s24, 0
      %p93 = por %p91, %p92
      %s95 = sadd.s32 %s94, 1
      %p98 = scmp.eq.s32.totalorder %s18, 3
      %p99 = scmp.ne.s32.totalorder %s94, %s96
      %p100 = scmp.eq.s32.totalorder %s18, 0
      %p101 = por %p99, %p100
      %p102 = scmp.ne.s32.totalorder %s94, %s96
      %p103 = scmp.eq.s32.totalorder %s23, 3
      %p104 = por %p102, %p103
      %p105 = scmp.ne.s32.totalorder %s96, %s97
      %p106 = scmp.eq.s32.totalorder %s23, 0
      %p107 = por %p105, %p106
      %p108 = scmp.ne.s32.totalorder %s96, %s97
      %p109 = scmp.eq.s32.totalorder %s24, 3
      %p110 = por %p108, %p109
      %p112 = scmp.ne.s32.totalorder %s97, %s111
      %p113 = scmp.eq.s32.totalorder %s24, 0
      %p114 = por %p112, %p113
      %s116 = sadd.s32 %s115, 1
      %p119 = scmp.eq.s32.totalorder %s18, 3
      %p120 = scmp.ne.s32.totalorder %s115, %s117
      %p121 = scmp.eq.s32.totalorder %s18, 0
      %p122 = por %p120, %p121
      %p123 = scmp.ne.s32.totalorder %s115, %s117
      %p124 = scmp.eq.s32.totalorder %s23, 3
      %p125 = por %p123, %p124
      %p126 = scmp.ne.s32.totalorder %s117, %s118
      %p127 = scmp.eq.s32.totalorder %s23, 0
      %p128 = por %p126, %p127
      %p129 = scmp.ne.s32.totalorder %s117, %s118
      %p130 = scmp.eq.s32.totalorder %s24, 3
      %p131 = por %p129, %p130
      %p133 = scmp.ne.s32.totalorder %s118, %s132
      %p134 = scmp.eq.s32.totalorder %s24, 0
      %p135 = por %p133, %p134
      %s137 = sadd.s32 %s136, 1
      %p140 = scmp.eq.s32.totalorder %s18, 3
      %p141 = scmp.ne.s32.totalorder %s136, %s138
      %p142 = scmp.eq.s32.totalorder %s18, 0
      %p143 = por %p141, %p142
      %p144 = scmp.ne.s32.totalorder %s136, %s138
      %p145 = scmp.eq.s32.totalorder %s23, 3
      %p146 = por %p144, %p145
      %p147 = scmp.ne.s32.totalorder %s138, %s139
      %p148 = scmp.eq.s32.totalorder %s23, 0
      %p149 = por %p147, %p148
      %p150 = scmp.ne.s32.totalorder %s138, %s139
      %p151 = scmp.eq.s32.totalorder %s24, 3
      %p152 = por %p150, %p151
      %p154 = scmp.ne.s32.totalorder %s139, %s153
      %p155 = scmp.eq.s32.totalorder %s24, 0
      %p156 = por %p154, %p155
      %s158 = sadd.s32 %s157, 1
      %p161 = scmp.eq.s32.totalorder %s18, 3
      %p162 = scmp.ne.s32.totalorder %s157, %s159
      %p163 = scmp.eq.s32.totalorder %s18, 0
      %p164 = por %p162, %p163
      %p165 = scmp.ne.s32.totalorder %s157, %s159
      %p166 = scmp.eq.s32.totalorder %s23, 3
      %p167 = por %p165, %p166
      %p168 = scmp.ne.s32.totalorder %s159, %s160
      %p169 = scmp.eq.s32.totalorder %s23, 0
      %p170 = por %p168, %p169
      %p171 = scmp.ne.s32.totalorder %s159, %s160
      %p172 = scmp.eq.s32.totalorder %s24, 3
      %p173 = por %p171, %p172
      %p175 = scmp.ne.s32.totalorder %s160, %s174
      %p176 = scmp.eq.s32.totalorder %s24, 0
      %p177 = por %p175, %p176
      %p178 = scmp.le.s32.totalorder 1, %s18
      %p179 = scmp.lt.s32.totalorder %s18, 5
      %p180 = pnand %p178, %p179
      %p181 = pneg %p180
      // Predicated region
      $region9: #{tpu_custom_call.1} parent=5 // pred_check
        _
      $region10: #{tpu_custom_call.1} parent=5 // pred_check_branch
        %183 = sbr.rel (%p180) target = $region12
      $region11: #{tpu_custom_call.1} parent=5 // pred_region
        %s184 = ssub.s32 %s18, 1
        // Predicated region
        $region13: #{tpu_custom_call.1} parent=11 // pred_check
          %p185 = pneg %p39
        $region14: #{tpu_custom_call.1} parent=11 // pred_check_branch
          %187 = sbr.rel (%p185) target = $region16
        $region15: #{tpu_custom_call.1} parent=11 // pred_region
          %s189 = ssub.s32 4096, 4096
          %190 = vsyncadd [#allocation4], %s189
          %s191 = sshll.u32 [#allocation3], 4
          %s192 = int_to_ptr.vmem [resolvable:$true] %s191
          %197 = dma.hbm_to_vmem [thread:$0]  %s0, 4096, %s192, [#allocation4], 256, 256, 16
        $region16: #{tpu_custom_call.1} parent=11 // pred_fallthru
          _
        // Predicated region
        $region17: #{tpu_custom_call.1} parent=11 // pred_check
          %p198 = pneg %p86
        $region18: #{tpu_custom_call.1} parent=11 // pred_check_branch
          %200 = sbr.rel (%p198) target = $region20
        $region19: #{tpu_custom_call.1} parent=11 // pred_region
          %s202 = ssub.s32 4096, 4096
          %203 = vsyncadd [#allocation7], %s202
          %s204 = sshll.u32 [#allocation8], 4
          %s205 = int_to_ptr.vmem [resolvable:$true] %s204
          %210 = dma.hbm_to_vmem [thread:$0]  %s2, 4096, %s205, [#allocation7], 64, 64, 4
        $region20: #{tpu_custom_call.1} parent=11 // pred_fallthru
          _
        // Predicated region
        $region21: #{tpu_custom_call.1} parent=11 // pred_check
          %p211 = pneg %p107
        $region22: #{tpu_custom_call.1} parent=11 // pred_check_branch
          %213 = sbr.rel (%p211) target = $region24
        $region23: #{tpu_custom_call.1} parent=11 // pred_region
          %s215 = ssub.s32 4096, 4096
          %216 = vsyncadd [#allocation10], %s215
          %s217 = sshll.u32 [#allocation9], 4
          %s218 = int_to_ptr.vmem [resolvable:$true] %s217
          %223 = dma.hbm_to_vmem [thread:$0]  %s3, 4096, %s218, [#allocation10], 64, 64, 4
        $region24: #{tpu_custom_call.1} parent=11 // pred_fallthru
          _
        // Predicated region
        $region25: #{tpu_custom_call.1} parent=11 // pred_check
          %p224 = pneg %p128
        $region26: #{tpu_custom_call.1} parent=11 // pred_check_branch
          %226 = sbr.rel (%p224) target = $region28
        $region27: #{tpu_custom_call.1} parent=11 // pred_region
          _
        $region28: #{tpu_custom_call.1} parent=11 // pred_fallthru
          _
        // Predicated region
        $region29: #{tpu_custom_call.1} parent=11 // pred_check
          %p227 = pneg %p149
        $region30: #{tpu_custom_call.1} parent=11 // pred_check_branch
          %229 = sbr.rel (%p227) target = $region32
        $region31: #{tpu_custom_call.1} parent=11 // pred_region
          _
        $region32: #{tpu_custom_call.1} parent=11 // pred_fallthru
          _
      $region12: #{tpu_custom_call.1} parent=5 // pred_fallthru
        _
      %p230 = scmp.lt.s32.totalorder %s18, 4
      // Predicated region
      $region33: #{tpu_custom_call.1} parent=5 // pred_check
        %p231 = pneg %p230
      $region34: #{tpu_custom_call.1} parent=5 // pred_check_branch
        %233 = sbr.rel (%p231) target = $region36
      $region35: #{tpu_custom_call.1} parent=5 // pred_region
        // Predicated region
        $region37: #{tpu_custom_call.1} parent=35 // pred_check
          %p234 = pneg %p59
        $region38: #{tpu_custom_call.1} parent=35 // pred_check_branch
          %236 = sbr.rel (%p234) target = $region40
        $region39: #{tpu_custom_call.1} parent=35 // pred_region
          %s237 = sand.u32 %s18, 1
          %s238 = scalar_lea.sflag [#allocation7], %s237
          %s239 = sand.u32 %s49, 1
          %s240 = smul.addr %s239, 64
          %s241 = scalar_lea.vmem [#allocation6], %s240
          %s242 = smul.u32 16, %s18
          %s244 = ssub.s32 1024, 1024
          %245 = vsyncadd %s238, %s244
          %s246 = smul.addr %s242, 64
          %s247 = scalar_lea.hbm %s1, %s246
          %s248 = sshll.u32 %s241, 4
          %s249 = int_to_ptr.vmem [resolvable:$true] %s248
          %254 = dma.hbm_to_vmem [thread:$0]  %s247, 1024, %s249, %s238, 64, 64, 4
        $region40: #{tpu_custom_call.1} parent=35 // pred_fallthru
          _
      $region36: #{tpu_custom_call.1} parent=5 // pred_fallthru
        _
      %p255 = scmp.le.s32.totalorder 1, %s18
      %p256 = scmp.lt.s32.totalorder %s18, 5
      %p257 = pnand %p255, %p256
      %p258 = pneg %p257
      // Predicated region
      $region41: #{tpu_custom_call.1} parent=5 // pred_check
        _
      $region42: #{tpu_custom_call.1} parent=5 // pred_check_branch
        %260 = sbr.rel (%p257) target = $region44
      $region43: #{tpu_custom_call.1} parent=5 // pred_region
        %s261 = ssub.s32 %s18, 1
        // Predicated region
        $region45: #{tpu_custom_call.1} parent=43 // pred_check
          %p262 = pneg %p39
        $region46: #{tpu_custom_call.1} parent=43 // pred_check_branch
          %264 = sbr.rel (%p262) target = $region48
        $region47: #{tpu_custom_call.1} parent=43 // pred_region
          %265 = dma.done [#allocation4], 4096
        $region48: #{tpu_custom_call.1} parent=43 // pred_fallthru
          _
        %s266 = sand.u32 %s23, 1
        %s267 = scalar_lea.sflag [#allocation7], %s266
        %s268 = sand.u32 %s52, 1
        %s269 = smul.addr %s268, 64
        %s270 = scalar_lea.vmem [#allocation6], %s269
        // Predicated region
        $region49: #{tpu_custom_call.1} parent=43 // pred_check
          %p271 = pneg %p65
        $region50: #{tpu_custom_call.1} parent=43 // pred_check_branch
          %273 = sbr.rel (%p271) target = $region52
        $region51: #{tpu_custom_call.1} parent=43 // pred_region
          %274 = dma.done %s267, 1024
        $region52: #{tpu_custom_call.1} parent=43 // pred_fallthru
          _
        // Predicated region
        $region53: #{tpu_custom_call.1} parent=43 // pred_check
          %p275 = pneg %p86
        $region54: #{tpu_custom_call.1} parent=43 // pred_check_branch
          %277 = sbr.rel (%p275) target = $region56
        $region55: #{tpu_custom_call.1} parent=43 // pred_region
          %278 = dma.done [#allocation7], 4096
        $region56: #{tpu_custom_call.1} parent=43 // pred_fallthru
          _
        // Predicated region
        $region57: #{tpu_custom_call.1} parent=43 // pred_check
          %p279 = pneg %p107
        $region58: #{tpu_custom_call.1} parent=43 // pred_check_branch
          %281 = sbr.rel (%p279) target = $region60
        $region59: #{tpu_custom_call.1} parent=43 // pred_region
          %282 = dma.done [#allocation10], 4096
        $region60: #{tpu_custom_call.1} parent=43 // pred_fallthru
          _
        %p283 = pneg %p39
        %p284 = pneg %p36
        %s285 = sand.u32 %s23, 1
        %s286 = scalar_lea.sflag [#allocation7], %s285
        %s287 = sand.u32 %s52, 1
        %s288 = smul.addr %s287, 64
        %s289 = scalar_lea.vmem [#allocation6], %s288
        %p290 = pneg %p65
        %p291 = pneg %p62
        %p292 = pneg %p86
        %p293 = pneg %p83
        %p294 = pneg %p107
        %p295 = pneg %p104
        %p296 = pneg %p128
        %p297 = pneg %p125
        %p298 = pneg %p149
        %p299 = pneg %p146
        %p300 = pneg %p170
        %p301 = pneg %p167
        %s302 = smul.u32 16, %s23
        %p304 = scmp.eq.s32.totalorder %s23, 0
        // Predicated region
        $region61: #{tpu_custom_call.1} parent=43 // pred_check
          %p305 = pneg %p304
        $region62: #{tpu_custom_call.1} parent=43 // pred_check_branch
          %307 = sbr.rel (%p305) target = $region64
        $region63: #{tpu_custom_call.1} parent=43 // pred_region
          %v308 = vld [vmem:[#allocation3] sm:$0xff]
          %v309 = vld [vmem:[#allocation3 + $0x8] sm:$0xff]
          %v310 = vld [vmem:[#allocation3 + $0x10] sm:$0xff]
          %v311 = vld [vmem:[#allocation3 + $0x18] sm:$0xff]
          %v312 = vld [vmem:[#allocation3 + $0x20] sm:$0xff]
          %v313 = vld [vmem:[#allocation3 + $0x28] sm:$0xff]
          %v314 = vld [vmem:[#allocation3 + $0x30] sm:$0xff]
          %v315 = vld [vmem:[#allocation3 + $0x38] sm:$0xff]
          %v316 = vld [vmem:[#allocation3 + $0x40] sm:$0xff]
          %v317 = vld [vmem:[#allocation3 + $0x48] sm:$0xff]
          %v318 = vld [vmem:[#allocation3 + $0x50] sm:$0xff]
          %v319 = vld [vmem:[#allocation3 + $0x58] sm:$0xff]
          %v320 = vld [vmem:[#allocation3 + $0x60] sm:$0xff]
          %v321 = vld [vmem:[#allocation3 + $0x68] sm:$0xff]
          %v322 = vld [vmem:[#allocation3 + $0x70] sm:$0xff]
          %v323 = vld [vmem:[#allocation3 + $0x78] sm:$0xff]
          %v324 = vld [vmem:[#allocation3 + $0x80] sm:$0xff]
          %v325 = vld [vmem:[#allocation3 + $0x88] sm:$0xff]
          %v326 = vld [vmem:[#allocation3 + $0x90] sm:$0xff]
          %v327 = vld [vmem:[#allocation3 + $0x98] sm:$0xff]
          %v328 = vld [vmem:[#allocation3 + $0xa0] sm:$0xff]
          %v329 = vld [vmem:[#allocation3 + $0xa8] sm:$0xff]
          %v330 = vld [vmem:[#allocation3 + $0xb0] sm:$0xff]
          %v331 = vld [vmem:[#allocation3 + $0xb8] sm:$0xff]
          %v332 = vld [vmem:[#allocation3 + $0xc0] sm:$0xff]
          %v333 = vld [vmem:[#allocation3 + $0xc8] sm:$0xff]
          %v334 = vld [vmem:[#allocation3 + $0xd0] sm:$0xff]
          %v335 = vld [vmem:[#allocation3 + $0xd8] sm:$0xff]
          %v336 = vld [vmem:[#allocation3 + $0xe0] sm:$0xff]
          %v337 = vld [vmem:[#allocation3 + $0xe8] sm:$0xff]
          %v338 = vld [vmem:[#allocation3 + $0xf0] sm:$0xff]
          %v339 = vld [vmem:[#allocation3 + $0xf8] sm:$0xff]
          %v340 = vld [vmem:[#allocation8] sm:$0xf]
          %v341 = vld [vmem:[#allocation8 + $0x4] sm:$0xf]
          %v342 = vld [vmem:[#allocation8 + $0x8] sm:$0xf]
          %v343 = vld [vmem:[#allocation8 + $0xc] sm:$0xf]
          %v344 = vld [vmem:[#allocation8 + $0x10] sm:$0xf]
          %v345 = vld [vmem:[#allocation8 + $0x14] sm:$0xf]
          %v346 = vld [vmem:[#allocation8 + $0x18] sm:$0xf]
          %v347 = vld [vmem:[#allocation8 + $0x1c] sm:$0xf]
          %v348 = vld [vmem:[#allocation8 + $0x20] sm:$0xf]
          %v349 = vld [vmem:[#allocation8 + $0x24] sm:$0xf]
          %v350 = vld [vmem:[#allocation8 + $0x28] sm:$0xf]
          %v351 = vld [vmem:[#allocation8 + $0x2c] sm:$0xf]
          %v352 = vld [vmem:[#allocation8 + $0x30] sm:$0xf]
          %v353 = vld [vmem:[#allocation8 + $0x34] sm:$0xf]
          %v354 = vld [vmem:[#allocation8 + $0x38] sm:$0xf]
          %v355 = vld [vmem:[#allocation8 + $0x3c] sm:$0xf]
          %v356 = vld [vmem:[#allocation8 + $0x40] sm:$0xf]
          %v357 = vld [vmem:[#allocation8 + $0x44] sm:$0xf]
          %v358 = vld [vmem:[#allocation8 + $0x48] sm:$0xf]
          %v359 = vld [vmem:[#allocation8 + $0x4c] sm:$0xf]
          %v360 = vld [vmem:[#allocation8 + $0x50] sm:$0xf]
          %v361 = vld [vmem:[#allocation8 + $0x54] sm:$0xf]
          %v362 = vld [vmem:[#allocation8 + $0x58] sm:$0xf]
          %v363 = vld [vmem:[#allocation8 + $0x5c] sm:$0xf]
          %v364 = vld [vmem:[#allocation8 + $0x60] sm:$0xf]
          %v365 = vld [vmem:[#allocation8 + $0x64] sm:$0xf]
          %v366 = vld [vmem:[#allocation8 + $0x68] sm:$0xf]
          %v367 = vld [vmem:[#allocation8 + $0x6c] sm:$0xf]
          %v368 = vld [vmem:[#allocation8 + $0x70] sm:$0xf]
          %v369 = vld [vmem:[#allocation8 + $0x74] sm:$0xf]
          %v370 = vld [vmem:[#allocation8 + $0x78] sm:$0xf]
          %v371 = vld [vmem:[#allocation8 + $0x7c] sm:$0xf]
          %v372 = vld [vmem:[#allocation8 + $0x80] sm:$0xf]
          %v373 = vld [vmem:[#allocation8 + $0x84] sm:$0xf]
          %v374 = vld [vmem:[#allocation8 + $0x88] sm:$0xf]
          %v375 = vld [vmem:[#allocation8 + $0x8c] sm:$0xf]
          %v376 = vld [vmem:[#allocation8 + $0x90] sm:$0xf]
          %v377 = vld [vmem:[#allocation8 + $0x94] sm:$0xf]
          %v378 = vld [vmem:[#allocation8 + $0x98] sm:$0xf]
          %v379 = vld [vmem:[#allocation8 + $0x9c] sm:$0xf]
          %v380 = vld [vmem:[#allocation8 + $0xa0] sm:$0xf]
          %v381 = vld [vmem:[#allocation8 + $0xa4] sm:$0xf]
          %v382 = vld [vmem:[#allocation8 + $0xa8] sm:$0xf]
          %v383 = vld [vmem:[#allocation8 + $0xac] sm:$0xf]
          %v384 = vld [vmem:[#allocation8 + $0xb0] sm:$0xf]
          %v385 = vld [vmem:[#allocation8 + $0xb4] sm:$0xf]
          %v386 = vld [vmem:[#allocation8 + $0xb8] sm:$0xf]
          %v387 = vld [vmem:[#allocation8 + $0xbc] sm:$0xf]
          %v388 = vld [vmem:[#allocation8 + $0xc0] sm:$0xf]
          %v389 = vld [vmem:[#allocation8 + $0xc4] sm:$0xf]
          %v390 = vld [vmem:[#allocation8 + $0xc8] sm:$0xf]
          %v391 = vld [vmem:[#allocation8 + $0xcc] sm:$0xf]
          %v392 = vld [vmem:[#allocation8 + $0xd0] sm:$0xf]
          %v393 = vld [vmem:[#allocation8 + $0xd4] sm:$0xf]
          %v394 = vld [vmem:[#allocation8 + $0xd8] sm:$0xf]
          %v395 = vld [vmem:[#allocation8 + $0xdc] sm:$0xf]
          %v396 = vld [vmem:[#allocation8 + $0xe0] sm:$0xf]
          %v397 = vld [vmem:[#allocation8 + $0xe4] sm:$0xf]
          %v398 = vld [vmem:[#allocation8 + $0xe8] sm:$0xf]
          %v399 = vld [vmem:[#allocation8 + $0xec] sm:$0xf]
          %v400 = vld [vmem:[#allocation8 + $0xf0] sm:$0xf]
          %v401 = vld [vmem:[#allocation8 + $0xf4] sm:$0xf]
          %v402 = vld [vmem:[#allocation8 + $0xf8] sm:$0xf]
          %v403 = vld [vmem:[#allocation8 + $0xfc] sm:$0xf]
          %v404 = vld [vmem:[%s4] sm:$0x1]
          %v406 = vlaneseq
          %v407 = vshrl.u32 %v406, 7
          %v408 = vsub.s32 0, %v407
          %v409 = vrot.slane %v404, %v408
          %v443 = vunpack.c.l.b16 %v308
          %v444 = vunpack.c.h.b16 %v308
          %v445 = vunpack.c.l.b16 %v309
          %v446 = vunpack.c.h.b16 %v309
          %v447 = vunpack.c.l.b16 %v310
          %v448 = vunpack.c.h.b16 %v310
          %v449 = vunpack.c.l.b16 %v311
          %v450 = vunpack.c.h.b16 %v311
          %v451 = vunpack.c.l.b16 %v312
          %v452 = vunpack.c.h.b16 %v312
          %v453 = vunpack.c.l.b16 %v313
          %v454 = vunpack.c.h.b16 %v313
          %v455 = vunpack.c.l.b16 %v314
          %v456 = vunpack.c.h.b16 %v314
          %v457 = vunpack.c.l.b16 %v315
          %v458 = vunpack.c.h.b16 %v315
          %v459 = vunpack.c.l.b16 %v316
          %v460 = vunpack.c.h.b16 %v316
          %v461 = vunpack.c.l.b16 %v317
          %v462 = vunpack.c.h.b16 %v317
          %v463 = vunpack.c.l.b16 %v318
          %v464 = vunpack.c.h.b16 %v318
          %v465 = vunpack.c.l.b16 %v319
          %v466 = vunpack.c.h.b16 %v319
          %v467 = vunpack.c.l.b16 %v320
          %v468 = vunpack.c.h.b16 %v320
          %v469 = vunpack.c.l.b16 %v321
          %v470 = vunpack.c.h.b16 %v321
          %v471 = vunpack.c.l.b16 %v322
          %v472 = vunpack.c.h.b16 %v322
          %v473 = vunpack.c.l.b16 %v323
          %v474 = vunpack.c.h.b16 %v323
          %v475 = vunpack.c.l.b16 %v324
          %v476 = vunpack.c.h.b16 %v324
          %v477 = vunpack.c.l.b16 %v325
          %v478 = vunpack.c.h.b16 %v325
          %v479 = vunpack.c.l.b16 %v326
          %v480 = vunpack.c.h.b16 %v326
          %v481 = vunpack.c.l.b16 %v327
          %v482 = vunpack.c.h.b16 %v327
          %v483 = vunpack.c.l.b16 %v328
          %v484 = vunpack.c.h.b16 %v328
          %v485 = vunpack.c.l.b16 %v329
          %v486 = vunpack.c.h.b16 %v329
          %v487 = vunpack.c.l.b16 %v330
          %v488 = vunpack.c.h.b16 %v330
          %v489 = vunpack.c.l.b16 %v331
          %v490 = vunpack.c.h.b16 %v331
          %v491 = vunpack.c.l.b16 %v332
          %v492 = vunpack.c.h.b16 %v332
          %v493 = vunpack.c.l.b16 %v333
          %v494 = vunpack.c.h.b16 %v333
          %v495 = vunpack.c.l.b16 %v334
          %v496 = vunpack.c.h.b16 %v334
          %v497 = vunpack.c.l.b16 %v335
          %v498 = vunpack.c.h.b16 %v335
          %v499 = vunpack.c.l.b16 %v336
          %v500 = vunpack.c.h.b16 %v336
          %v501 = vunpack.c.l.b16 %v337
          %v502 = vunpack.c.h.b16 %v337
          %v503 = vunpack.c.l.b16 %v338
          %v504 = vunpack.c.h.b16 %v338
          %v505 = vunpack.c.l.b16 %v339
          %v506 = vunpack.c.h.b16 %v339
          %v507 = vpack.c.b16 %v447, %v443
          %v508 = vpack.c.b16 %v448, %v444
          %v509 = vpack.c.b16 %v449, %v445
          %v510 = vpack.c.b16 %v450, %v446
          %v511 = vpack.c.b16 %v455, %v451
          %v512 = vpack.c.b16 %v456, %v452
          %v513 = vpack.c.b16 %v457, %v453
          %v514 = vpack.c.b16 %v458, %v454
          %v515 = vpack.c.b16 %v463, %v459
          %v516 = vpack.c.b16 %v464, %v460
          %v517 = vpack.c.b16 %v465, %v461
          %v518 = vpack.c.b16 %v466, %v462
          %v519 = vpack.c.b16 %v471, %v467
          %v520 = vpack.c.b16 %v472, %v468
          %v521 = vpack.c.b16 %v473, %v469
          %v522 = vpack.c.b16 %v474, %v470
          %v523 = vpack.c.b16 %v479, %v475
          %v524 = vpack.c.b16 %v480, %v476
          %v525 = vpack.c.b16 %v481, %v477
          %v526 = vpack.c.b16 %v482, %v478
          %v527 = vpack.c.b16 %v487, %v483
          %v528 = vpack.c.b16 %v488, %v484
          %v529 = vpack.c.b16 %v489, %v485
          %v530 = vpack.c.b16 %v490, %v486
          %v531 = vpack.c.b16 %v495, %v491
          %v532 = vpack.c.b16 %v496, %v492
          %v533 = vpack.c.b16 %v497, %v493
          %v534 = vpack.c.b16 %v498, %v494
          %v535 = vpack.c.b16 %v503, %v499
          %v536 = vpack.c.b16 %v504, %v500
          %v537 = vpack.c.b16 %v505, %v501
          %v538 = vpack.c.b16 %v506, %v502
          %v635 = vunpack.c.l.b16 %v340
          %v636 = vunpack.c.l.b16 %v341
          %v637 = vunpack.c.l.b16 %v342
          %v638 = vunpack.c.l.b16 %v343
          %v639 = vunpack.c.l.b16 %v344
          %v640 = vunpack.c.l.b16 %v345
          %v641 = vunpack.c.l.b16 %v346
          %v642 = vunpack.c.l.b16 %v347
          %v643 = vunpack.c.l.b16 %v348
          %v644 = vunpack.c.l.b16 %v349
          %v645 = vunpack.c.l.b16 %v350
          %v646 = vunpack.c.l.b16 %v351
          %v647 = vunpack.c.l.b16 %v352
          %v648 = vunpack.c.l.b16 %v353
          %v649 = vunpack.c.l.b16 %v354
          %v650 = vunpack.c.l.b16 %v355
          %v651 = vunpack.c.l.b16 %v356
          %v652 = vunpack.c.l.b16 %v357
          %v653 = vunpack.c.l.b16 %v358
          %v654 = vunpack.c.l.b16 %v359
          %v655 = vunpack.c.l.b16 %v360
          %v656 = vunpack.c.l.b16 %v361
          %v657 = vunpack.c.l.b16 %v362
          %v658 = vunpack.c.l.b16 %v363
          %v659 = vunpack.c.l.b16 %v364
          %v660 = vunpack.c.l.b16 %v365
          %v661 = vunpack.c.l.b16 %v366
          %v662 = vunpack.c.l.b16 %v367
          %v663 = vunpack.c.l.b16 %v368
          %v664 = vunpack.c.l.b16 %v369
          %v665 = vunpack.c.l.b16 %v370
          %v666 = vunpack.c.l.b16 %v371
          %v667 = vunpack.c.l.b16 %v372
          %v668 = vunpack.c.l.b16 %v373
          %v669 = vunpack.c.l.b16 %v374
          %v670 = vunpack.c.l.b16 %v375
          %v671 = vunpack.c.l.b16 %v376
          %v672 = vunpack.c.l.b16 %v377
          %v673 = vunpack.c.l.b16 %v378
          %v674 = vunpack.c.l.b16 %v379
          %v675 = vunpack.c.l.b16 %v380
          %v676 = vunpack.c.l.b16 %v381
          %v677 = vunpack.c.l.b16 %v382
          %v678 = vunpack.c.l.b16 %v383
          %v679 = vunpack.c.l.b16 %v384
          %v680 = vunpack.c.l.b16 %v385
          %v681 = vunpack.c.l.b16 %v386
          %v682 = vunpack.c.l.b16 %v387
          %v683 = vunpack.c.l.b16 %v388
          %v684 = vunpack.c.l.b16 %v389
          %v685 = vunpack.c.l.b16 %v390
          %v686 = vunpack.c.l.b16 %v391
          %v687 = vunpack.c.l.b16 %v392
          %v688 = vunpack.c.l.b16 %v393
          %v689 = vunpack.c.l.b16 %v394
          %v690 = vunpack.c.l.b16 %v395
          %v691 = vunpack.c.l.b16 %v396
          %v692 = vunpack.c.l.b16 %v397
          %v693 = vunpack.c.l.b16 %v398
          %v694 = vunpack.c.l.b16 %v399
          %v695 = vunpack.c.l.b16 %v400
          %v696 = vunpack.c.l.b16 %v401
          %v697 = vunpack.c.l.b16 %v402
          %v698 = vunpack.c.l.b16 %v403
          %v699 = vpack.c.b16 %v636, %v635
          %v700 = vpack.c.b16 %v638, %v637
          %v701 = vpack.c.b16 %v640, %v639
          %v702 = vpack.c.b16 %v642, %v641
          %v703 = vpack.c.b16 %v644, %v643
          %v704 = vpack.c.b16 %v646, %v645
          %v705 = vpack.c.b16 %v648, %v647
          %v706 = vpack.c.b16 %v650, %v649
          %v707 = vpack.c.b16 %v652, %v651
          %v708 = vpack.c.b16 %v654, %v653
          %v709 = vpack.c.b16 %v656, %v655
          %v710 = vpack.c.b16 %v658, %v657
          %v711 = vpack.c.b16 %v660, %v659
          %v712 = vpack.c.b16 %v662, %v661
          %v713 = vpack.c.b16 %v664, %v663
          %v714 = vpack.c.b16 %v666, %v665
          %v715 = vpack.c.b16 %v668, %v667
          %v716 = vpack.c.b16 %v670, %v669
          %v717 = vpack.c.b16 %v672, %v671
          %v718 = vpack.c.b16 %v674, %v673
          %v719 = vpack.c.b16 %v676, %v675
          %v720 = vpack.c.b16 %v678, %v677
          %v721 = vpack.c.b16 %v680, %v679
          %v722 = vpack.c.b16 %v682, %v681
          %v723 = vpack.c.b16 %v684, %v683
          %v724 = vpack.c.b16 %v686, %v685
          %v725 = vpack.c.b16 %v688, %v687
          %v726 = vpack.c.b16 %v690, %v689
          %v727 = vpack.c.b16 %v692, %v691
          %v728 = vpack.c.b16 %v694, %v693
          %v729 = vpack.c.b16 %v696, %v695
          %v730 = vpack.c.b16 %v698, %v697
          %763 = vmatprep.subr.bf16.mxu0 0
          %764 = vmatpush1.bf16.msra.mxu0 %v699
          %765 = vmatprep.subr.bf16.mxu0 0
          %766 = vmatpush1.bf16.msra.mxu0 %v700
          %767 = vmatprep.subr.bf16.mxu0 0
          %768 = vmatpush1.bf16.msra.mxu0 %v701
          %769 = vmatprep.subr.bf16.mxu0 0
          %770 = vmatpush1.bf16.msra.mxu0 %v702
          %771 = vmatprep.subr.bf16.mxu0 0
          %772 = vmatpush1.bf16.msra.mxu0 %v703
          %773 = vmatprep.subr.bf16.mxu0 0
          %774 = vmatpush1.bf16.msra.mxu0 %v704
          %775 = vmatprep.subr.bf16.mxu0 0
          %776 = vmatpush1.bf16.msra.mxu0 %v705
          %777 = vmatprep.subr.bf16.mxu0 0
          %778 = vmatpush1.bf16.msra.mxu0 %v706
          %779 = vmatprep.subr.bf16.mxu0 0
          %780 = vmatpush1.bf16.msra.mxu0 %v707
          %781 = vmatprep.subr.bf16.mxu0 0
          %782 = vmatpush1.bf16.msra.mxu0 %v708
          %783 = vmatprep.subr.bf16.mxu0 0
          %784 = vmatpush1.bf16.msra.mxu0 %v709
          %785 = vmatprep.subr.bf16.mxu0 0
          %786 = vmatpush1.bf16.msra.mxu0 %v710
          %787 = vmatprep.subr.bf16.mxu0 0
          %788 = vmatpush1.bf16.msra.mxu0 %v711
          %789 = vmatprep.subr.bf16.mxu0 0
          %790 = vmatpush1.bf16.msra.mxu0 %v712
          %791 = vmatprep.subr.bf16.mxu0 0
          %792 = vmatpush1.bf16.msra.mxu0 %v713
          %793 = vmatprep.subr.bf16.mxu0 0
          %794 = vmatpush1.bf16.msra.mxu0 %v714
          %795 = vmatprep.mubr.bf16.mxu0 %v508
          %796 = vmatmul.mubr.bf16.gmra.mrb[0].mxu0 %v507
          %v797 = vpop.f32.mrb[0].mxu0
          %v798 = vadd.f32 %v409, %v797
          %v799 = vpop.f32.mrb[0].mxu0
          %v800 = vpop.f32.mrb[0].mxu0
          %v801 = vadd.f32 %v409, %v800
          %v802 = vpop.f32.mrb[0].mxu0
          %803 = vmatprep.mubr.bf16.mxu0 %v512
          %804 = vmatmul.mubr.bf16.gmra.mrb[0].mxu0 %v511
          %v805 = vpop.f32.mrb[0].mxu0
          %v806 = vadd.f32 %v409, %v805
          %v807 = vpop.f32.mrb[0].mxu0
          %v808 = vpop.f32.mrb[0].mxu0
          %v809 = vadd.f32 %v409, %v808
          %v810 = vpop.f32.mrb[0].mxu0
          %811 = vmatprep.mubr.bf16.mxu0 %v516
          %812 = vmatmul.mubr.bf16.gmra.mrb[0].mxu0 %v515
          %v813 = vpop.f32.mrb[0].mxu0
          %v814 = vadd.f32 %v409, %v813
          %v815 = vpop.f32.mrb[0].mxu0
          %v816 = vpop.f32.mrb[0].mxu0
          %v817 = vadd.f32 %v409, %v816
          %v818 = vpop.f32.mrb[0].mxu0
          %819 = vmatprep.mubr.bf16.mxu0 %v520
          %820 = vmatmul.mubr.bf16.gmra.mrb[0].mxu0 %v519
          %v821 = vpop.f32.mrb[0].mxu0
          %v822 = vadd.f32 %v409, %v821
          %v823 = vpop.f32.mrb[0].mxu0
          %v824 = vpop.f32.mrb[0].mxu0
          %v825 = vadd.f32 %v409, %v824
          %v826 = vpop.f32.mrb[0].mxu0
          %827 = vmatprep.mubr.bf16.mxu0 %v524
          %828 = vmatmul.mubr.bf16.gmra.mrb[0].mxu0 %v523
          %v829 = vpop.f32.mrb[0].mxu0
          %v830 = vadd.f32 %v409, %v829
          %v831 = vpop.f32.mrb[0].mxu0
          %v832 = vpop.f32.mrb[0].mxu0
          %v833 = vadd.f32 %v409, %v832
          %v834 = vpop.f32.mrb[0].mxu0
          %835 = vmatprep.mubr.bf16.mxu0 %v528
          %836 = vmatmul.mubr.bf16.gmra.mrb[0].mxu0 %v527
          %v837 = vpop.f32.mrb[0].mxu0
          %v838 = vadd.f32 %v409, %v837
          %v839 = vpop.f32.mrb[0].mxu0
          %v840 = vpop.f32.mrb[0].mxu0
          %v841 = vadd.f32 %v409, %v840
          %v842 = vpop.f32.mrb[0].mxu0
          %843 = vmatprep.mubr.bf16.mxu0 %v532
          %844 = vmatmul.mubr.bf16.gmra.mrb[0].mxu0 %v531
          %v845 = vpop.f32.mrb[0].mxu0
          %v846 = vadd.f32 %v409, %v845
          %v847 = vpop.f32.mrb[0].mxu0
          %v848 = vpop.f32.mrb[0].mxu0
          %v849 = vadd.f32 %v409, %v848
          %v850 = vpop.f32.mrb[0].mxu0
          %851 = vmatprep.mubr.bf16.mxu0 %v536
          %852 = vmatmul.mubr.bf16.gmra.mrb[0].mxu0 %v535
          %v853 = vpop.f32.mrb[0].mxu0
          %v854 = vadd.f32 %v409, %v853
          %v855 = vpop.f32.mrb[0].mxu0
          %v856 = vpop.f32.mrb[0].mxu0
          %v857 = vadd.f32 %v409, %v856
          %v858 = vpop.f32.mrb[0].mxu0
          %859 = vdwg.mxu0
          %860 = vmatprep.subr.bf16.mxu0 0
          %861 = vmatpush1.bf16.msra.mxu0 %v715
          %862 = vmatprep.subr.bf16.mxu0 0
          %863 = vmatpush1.bf16.msra.mxu0 %v716
          %864 = vmatprep.subr.bf16.mxu0 0
          %865 = vmatpush1.bf16.msra.mxu0 %v717
          %866 = vmatprep.subr.bf16.mxu0 0
          %867 = vmatpush1.bf16.msra.mxu0 %v718
          %868 = vmatprep.subr.bf16.mxu0 0
          %869 = vmatpush1.bf16.msra.mxu0 %v719
          %870 = vmatprep.subr.bf16.mxu0 0
          %871 = vmatpush1.bf16.msra.mxu0 %v720
          %872 = vmatprep.subr.bf16.mxu0 0
          %873 = vmatpush1.bf16.msra.mxu0 %v721
          %874 = vmatprep.subr.bf16.mxu0 0
          %875 = vmatpush1.bf16.msra.mxu0 %v722
          %876 = vmatprep.subr.bf16.mxu0 0
          %877 = vmatpush1.bf16.msra.mxu0 %v723
          %878 = vmatprep.subr.bf16.mxu0 0
          %879 = vmatpush1.bf16.msra.mxu0 %v724
          %880 = vmatprep.subr.bf16.mxu0 0
          %881 = vmatpush1.bf16.msra.mxu0 %v725
          %882 = vmatprep.subr.bf16.mxu0 0
          %883 = vmatpush1.bf16.msra.mxu0 %v726
          %884 = vmatprep.subr.bf16.mxu0 0
          %885 = vmatpush1.bf16.msra.mxu0 %v727
          %886 = vmatprep.subr.bf16.mxu0 0
          %887 = vmatpush1.bf16.msra.mxu0 %v728
          %888 = vmatprep.subr.bf16.mxu0 0
          %889 = vmatpush1.bf16.msra.mxu0 %v729
          %890 = vmatprep.subr.bf16.mxu0 0
          %891 = vmatpush1.bf16.msra.mxu0 %v730
          %892 = vmatprep.mubr.bf16.mxu0 %v510
          %893 = vmatmul.mubr.bf16.gmra.mrb[0].mxu0 %v509
          %v894 = vpop.f32.mrb[0].mxu0
          %v895 = vadd.f32 %v798, %v894
          %v896 = vpop.f32.mrb[0].mxu0
          %v897 = vpop.f32.mrb[0].mxu0
          %v898 = vadd.f32 %v801, %v897
          %v899 = vpop.f32.mrb[0].mxu0
          %900 = vmatprep.mubr.bf16.mxu0 %v514
          %901 = vmatmul.mubr.bf16.gmra.mrb[0].mxu0 %v513
          %v902 = vpop.f32.mrb[0].mxu0
          %v903 = vadd.f32 %v806, %v902
          %v904 = vpop.f32.mrb[0].mxu0
          %v905 = vpop.f32.mrb[0].mxu0
          %v906 = vadd.f32 %v809, %v905
          %v907 = vpop.f32.mrb[0].mxu0
          %908 = vmatprep.mubr.bf16.mxu0 %v518
          %909 = vmatmul.mubr.bf16.gmra.mrb[0].mxu0 %v517
          %v910 = vpop.f32.mrb[0].mxu0
          %v911 = vadd.f32 %v814, %v910
          %v912 = vpop.f32.mrb[0].mxu0
          %v913 = vpop.f32.mrb[0].mxu0
          %v914 = vadd.f32 %v817, %v913
          %v915 = vpop.f32.mrb[0].mxu0
          %916 = vmatprep.mubr.bf16.mxu0 %v522
          %917 = vmatmul.mubr.bf16.gmra.mrb[0].mxu0 %v521
          %v918 = vpop.f32.mrb[0].mxu0
          %v919 = vadd.f32 %v822, %v918
          %v920 = vpop.f32.mrb[0].mxu0
          %v921 = vpop.f32.mrb[0].mxu0
          %v922 = vadd.f32 %v825, %v921
          %v923 = vpop.f32.mrb[0].mxu0
          %924 = vmatprep.mubr.bf16.mxu0 %v526
          %925 = vmatmul.mubr.bf16.gmra.mrb[0].mxu0 %v525
          %v926 = vpop.f32.mrb[0].mxu0
          %v927 = vadd.f32 %v830, %v926
          %v928 = vpop.f32.mrb[0].mxu0
          %v929 = vpop.f32.mrb[0].mxu0
          %v930 = vadd.f32 %v833, %v929
          %v931 = vpop.f32.mrb[0].mxu0
          %932 = vmatprep.mubr.bf16.mxu0 %v530
          %933 = vmatmul.mubr.bf16.gmra.mrb[0].mxu0 %v529
          %v934 = vpop.f32.mrb[0].mxu0
          %v935 = vadd.f32 %v838, %v934
          %v936 = vpop.f32.mrb[0].mxu0
          %v937 = vpop.f32.mrb[0].mxu0
          %v938 = vadd.f32 %v841, %v937
          %v939 = vpop.f32.mrb[0].mxu0
          %940 = vmatprep.mubr.bf16.mxu0 %v534
          %941 = vmatmul.mubr.bf16.gmra.mrb[0].mxu0 %v533
          %v942 = vpop.f32.mrb[0].mxu0
          %v943 = vadd.f32 %v846, %v942
          %v944 = vpop.f32.mrb[0].mxu0
          %v945 = vpop.f32.mrb[0].mxu0
          %v946 = vadd.f32 %v849, %v945
          %v947 = vpop.f32.mrb[0].mxu0
          %948 = vmatprep.mubr.bf16.mxu0 %v538
          %949 = vmatmul.mubr.bf16.gmra.mrb[0].mxu0 %v537
          %v950 = vpop.f32.mrb[0].mxu0
          %v951 = vadd.f32 %v854, %v950
          %v952 = vpop.f32.mrb[0].mxu0
          %v953 = vpop.f32.mrb[0].mxu0
          %v954 = vadd.f32 %v857, %v953
          %v955 = vpop.f32.mrb[0].mxu0
          %956 = vdwg.mxu0
          %v957 = vmax.f32 %v895, 0.0
          %v958 = vmax.f32 %v898, 0.0
          %v959 = vmax.f32 %v903, 0.0
          %v960 = vmax.f32 %v906, 0.0
          %v961 = vmax.f32 %v911, 0.0
          %v962 = vmax.f32 %v914, 0.0
          %v963 = vmax.f32 %v919, 0.0
          %v964 = vmax.f32 %v922, 0.0
          %v965 = vmax.f32 %v927, 0.0
          %v966 = vmax.f32 %v930, 0.0
          %v967 = vmax.f32 %v935, 0.0
          %v968 = vmax.f32 %v938, 0.0
          %v969 = vmax.f32 %v943, 0.0
          %v970 = vmax.f32 %v946, 0.0
          %v971 = vmax.f32 %v951, 0.0
          %v972 = vmax.f32 %v954, 0.0
          %v973 = vpack.c.bf16 %v958, %v957
          %v974 = vpack.c.bf16 %v960, %v959
          %v975 = vpack.c.bf16 %v962, %v961
          %v976 = vpack.c.bf16 %v964, %v963
          %v977 = vpack.c.bf16 %v966, %v965
          %v978 = vpack.c.bf16 %v968, %v967
          %v979 = vpack.c.bf16 %v970, %v969
          %v980 = vpack.c.bf16 %v972, %v971
          %981 = vst [vmem:[#allocation2] sm:$0xff] %v973
          %982 = vst [vmem:[#allocation2 + $0x8] sm:$0xff] %v974
          %983 = vst [vmem:[#allocation2 + $0x10] sm:$0xff] %v975
          %984 = vst [vmem:[#allocation2 + $0x18] sm:$0xff] %v976
          %985 = vst [vmem:[#allocation2 + $0x20] sm:$0xff] %v977
          %986 = vst [vmem:[#allocation2 + $0x28] sm:$0xff] %v978
          %987 = vst [vmem:[#allocation2 + $0x30] sm:$0xff] %v979
          %988 = vst [vmem:[#allocation2 + $0x38] sm:$0xff] %v980
          %989 = vst [vmem:[#allocation11] sm:$0xff] 0.0
          %990 = vst [vmem:[#allocation11 + $0x8] sm:$0xff] 0.0
          %991 = vst [vmem:[#allocation11 + $0x10] sm:$0xff] 0.0
          %992 = vst [vmem:[#allocation11 + $0x18] sm:$0xff] 0.0
          %993 = vst [vmem:[#allocation11 + $0x20] sm:$0xff] 0.0
          %994 = vst [vmem:[#allocation11 + $0x28] sm:$0xff] 0.0
          %995 = vst [vmem:[#allocation11 + $0x30] sm:$0xff] 0.0
          %996 = vst [vmem:[#allocation11 + $0x38] sm:$0xff] 0.0
          %997 = vst [vmem:[#allocation11 + $0x40] sm:$0xff] 0.0
          %998 = vst [vmem:[#allocation11 + $0x48] sm:$0xff] 0.0
          %999 = vst [vmem:[#allocation11 + $0x50] sm:$0xff] 0.0
          %1000 = vst [vmem:[#allocation11 + $0x58] sm:$0xff] 0.0
          %1001 = vst [vmem:[#allocation11 + $0x60] sm:$0xff] 0.0
          %1002 = vst [vmem:[#allocation11 + $0x68] sm:$0xff] 0.0
          %1003 = vst [vmem:[#allocation11 + $0x70] sm:$0xff] 0.0
          %1004 = vst [vmem:[#allocation11 + $0x78] sm:$0xff] 0.0
        $region64: #{tpu_custom_call.1} parent=43 // pred_fallthru
          _
        %v1005 = vld [vmem:[#allocation2] sm:$0xff]
        %v1006 = vld [vmem:[#allocation2 + $0x8] sm:$0xff]
        %v1007 = vld [vmem:[#allocation2 + $0x10] sm:$0xff]
        %v1008 = vld [vmem:[#allocation2 + $0x18] sm:$0xff]
        %v1009 = vld [vmem:[#allocation2 + $0x20] sm:$0xff]
        %v1010 = vld [vmem:[#allocation2 + $0x28] sm:$0xff]
        %v1011 = vld [vmem:[#allocation2 + $0x30] sm:$0xff]
        %v1012 = vld [vmem:[#allocation2 + $0x38] sm:$0xff]
        %s1013 = smul.u32 %s23, 16
        %s1014 = smul.addr %s1013, 4
        %s1015 = scalar_lea.vmem [#allocation9], %s1014
        %v1016 = vld [vmem:[%s1015] sm:$0xf]
        %v1017 = vld [vmem:[%s1015 + $0x4] sm:$0xf]
        %v1018 = vld [vmem:[%s1015 + $0x8] sm:$0xf]
        %v1019 = vld [vmem:[%s1015 + $0xc] sm:$0xf]
        %v1020 = vld [vmem:[%s1015 + $0x10] sm:$0xf]
        %v1021 = vld [vmem:[%s1015 + $0x14] sm:$0xf]
        %v1022 = vld [vmem:[%s1015 + $0x18] sm:$0xf]
        %v1023 = vld [vmem:[%s1015 + $0x1c] sm:$0xf]
        %v1024 = vld [vmem:[%s1015 + $0x20] sm:$0xf]
        %v1025 = vld [vmem:[%s1015 + $0x24] sm:$0xf]
        %v1026 = vld [vmem:[%s1015 + $0x28] sm:$0xf]
        %v1027 = vld [vmem:[%s1015 + $0x2c] sm:$0xf]
        %v1028 = vld [vmem:[%s1015 + $0x30] sm:$0xf]
        %v1029 = vld [vmem:[%s1015 + $0x34] sm:$0xf]
        %v1030 = vld [vmem:[%s1015 + $0x38] sm:$0xf]
        %v1031 = vld [vmem:[%s1015 + $0x3c] sm:$0xf]
        %v1048 = vunpack.c.l.b16 %v1016
        %v1049 = vunpack.c.l.b16 %v1017
        %v1050 = vunpack.c.l.b16 %v1018
        %v1051 = vunpack.c.l.b16 %v1019
        %v1052 = vunpack.c.l.b16 %v1020
        %v1053 = vunpack.c.l.b16 %v1021
        %v1054 = vunpack.c.l.b16 %v1022
        %v1055 = vunpack.c.l.b16 %v1023
        %v1056 = vunpack.c.l.b16 %v1024
        %v1057 = vunpack.c.l.b16 %v1025
        %v1058 = vunpack.c.l.b16 %v1026
        %v1059 = vunpack.c.l.b16 %v1027
        %v1060 = vunpack.c.l.b16 %v1028
        %v1061 = vunpack.c.l.b16 %v1029
        %v1062 = vunpack.c.l.b16 %v1030
        %v1063 = vunpack.c.l.b16 %v1031
        %v1064 = vpack.c.b16 %v1049, %v1048
        %v1065 = vpack.c.b16 %v1051, %v1050
        %v1066 = vpack.c.b16 %v1053, %v1052
        %v1067 = vpack.c.b16 %v1055, %v1054
        %v1068 = vpack.c.b16 %v1057, %v1056
        %v1069 = vpack.c.b16 %v1059, %v1058
        %v1070 = vpack.c.b16 %v1061, %v1060
        %v1071 = vpack.c.b16 %v1063, %v1062
        %1080 = vmatprep.subr.bf16.mxu0 0
        %1081 = vmatpush1.bf16.msra.mxu0 %v1064
        %1082 = vmatprep.subr.bf16.mxu0 0
        %1083 = vmatpush1.bf16.msra.mxu0 %v1065
        %1084 = vmatprep.subr.bf16.mxu0 0
        %1085 = vmatpush1.bf16.msra.mxu0 %v1066
        %1086 = vmatprep.subr.bf16.mxu0 0
        %1087 = vmatpush1.bf16.msra.mxu0 %v1067
        %1088 = vmatprep.subr.bf16.mxu0 0
        %1089 = vmatpush1.bf16.msra.mxu0 %v1068
        %1090 = vmatprep.subr.bf16.mxu0 0
        %1091 = vmatpush1.bf16.msra.mxu0 %v1069
        %1092 = vmatprep.subr.bf16.mxu0 0
        %1093 = vmatpush1.bf16.msra.mxu0 %v1070
        %1094 = vmatprep.subr.bf16.mxu0 0
        %1095 = vmatpush1.bf16.msra.mxu0 %v1071
        %1096 = vmatprep.subr.bf16.mxu0 0
        %1097 = vmatpush1.bf16.msra.mxu0 0
        %1098 = vmatprep.subr.bf16.mxu0 0
        %1099 = vmatpush1.bf16.msra.mxu0 0
        %1100 = vmatprep.subr.bf16.mxu0 0
        %1101 = vmatpush1.bf16.msra.mxu0 0
        %1102 = vmatprep.subr.bf16.mxu0 0
        %1103 = vmatpush1.bf16.msra.mxu0 0
        %1104 = vmatprep.subr.bf16.mxu0 0
        %1105 = vmatpush1.bf16.msra.mxu0 0
        %1106 = vmatprep.subr.bf16.mxu0 0
        %1107 = vmatpush1.bf16.msra.mxu0 0
        %1108 = vmatprep.subr.bf16.mxu0 0
        %1109 = vmatpush1.bf16.msra.mxu0 0
        %1110 = vmatprep.subr.bf16.mxu0 0
        %1111 = vmatpush1.bf16.msra.mxu0 0
        %1112 = vmatprep.mubr.bf16.mxu0 0
        %1113 = vmatmul.mubr.bf16.gmra.mrb[0].mxu0 %v1005
        %v1114 = vpop.f32.mrb[0].mxu0
        %v1115 = vadd.f32 0.0, %v1114
        %v1116 = vpop.f32.mrb[0].mxu0
        %v1117 = vpop.f32.mrb[0].mxu0
        %v1118 = vadd.f32 0.0, %v1117
        %v1119 = vpop.f32.mrb[0].mxu0
        %1120 = vmatprep.mubr.bf16.mxu0 0
        %1121 = vmatmul.mubr.bf16.gmra.mrb[0].mxu0 %v1006
        %v1122 = vpop.f32.mrb[0].mxu0
        %v1123 = vadd.f32 0.0, %v1122
        %v1124 = vpop.f32.mrb[0].mxu0
        %v1125 = vpop.f32.mrb[0].mxu0
        %v1126 = vadd.f32 0.0, %v1125
        %v1127 = vpop.f32.mrb[0].mxu0
        %1128 = vmatprep.mubr.bf16.mxu0 0
        %1129 = vmatmul.mubr.bf16.gmra.mrb[0].mxu0 %v1007
        %v1130 = vpop.f32.mrb[0].mxu0
        %v1131 = vadd.f32 0.0, %v1130
        %v1132 = vpop.f32.mrb[0].mxu0
        %v1133 = vpop.f32.mrb[0].mxu0
        %v1134 = vadd.f32 0.0, %v1133
        %v1135 = vpop.f32.mrb[0].mxu0
        %1136 = vmatprep.mubr.bf16.mxu0 0
        %1137 = vmatmul.mubr.bf16.gmra.mrb[0].mxu0 %v1008
        %v1138 = vpop.f32.mrb[0].mxu0
        %v1139 = vadd.f32 0.0, %v1138
        %v1140 = vpop.f32.mrb[0].mxu0
        %v1141 = vpop.f32.mrb[0].mxu0
        %v1142 = vadd.f32 0.0, %v1141
        %v1143 = vpop.f32.mrb[0].mxu0
        %1144 = vmatprep.mubr.bf16.mxu0 0
        %1145 = vmatmul.mubr.bf16.gmra.mrb[0].mxu0 %v1009
        %v1146 = vpop.f32.mrb[0].mxu0
        %v1147 = vadd.f32 0.0, %v1146
        %v1148 = vpop.f32.mrb[0].mxu0
        %v1149 = vpop.f32.mrb[0].mxu0
        %v1150 = vadd.f32 0.0, %v1149
        %v1151 = vpop.f32.mrb[0].mxu0
        %1152 = vmatprep.mubr.bf16.mxu0 0
        %1153 = vmatmul.mubr.bf16.gmra.mrb[0].mxu0 %v1010
        %v1154 = vpop.f32.mrb[0].mxu0
        %v1155 = vadd.f32 0.0, %v1154
        %v1156 = vpop.f32.mrb[0].mxu0
        %v1157 = vpop.f32.mrb[0].mxu0
        %v1158 = vadd.f32 0.0, %v1157
        %v1159 = vpop.f32.mrb[0].mxu0
        %1160 = vmatprep.mubr.bf16.mxu0 0
        %1161 = vmatmul.mubr.bf16.gmra.mrb[0].mxu0 %v1011
        %v1162 = vpop.f32.mrb[0].mxu0
        %v1163 = vadd.f32 0.0, %v1162
        %v1164 = vpop.f32.mrb[0].mxu0
        %v1165 = vpop.f32.mrb[0].mxu0
        %v1166 = vadd.f32 0.0, %v1165
        %v1167 = vpop.f32.mrb[0].mxu0
        %1168 = vmatprep.mubr.bf16.mxu0 0
        %1169 = vmatmul.mubr.bf16.gmra.mrb[0].mxu0 %v1012
        %v1170 = vpop.f32.mrb[0].mxu0
        %v1171 = vadd.f32 0.0, %v1170
        %v1172 = vpop.f32.mrb[0].mxu0
        %v1173 = vpop.f32.mrb[0].mxu0
        %v1174 = vadd.f32 0.0, %v1173
        %v1175 = vpop.f32.mrb[0].mxu0
        %1176 = vdwg.mxu0
        %v1177 = vld [vmem:[#allocation11] sm:$0xff]
        %v1178 = vld [vmem:[#allocation11 + $0x8] sm:$0xff]
        %v1179 = vld [vmem:[#allocation11 + $0x10] sm:$0xff]
        %v1180 = vld [vmem:[#allocation11 + $0x18] sm:$0xff]
        %v1181 = vld [vmem:[#allocation11 + $0x20] sm:$0xff]
        %v1182 = vld [vmem:[#allocation11 + $0x28] sm:$0xff]
        %v1183 = vld [vmem:[#allocation11 + $0x30] sm:$0xff]
        %v1184 = vld [vmem:[#allocation11 + $0x38] sm:$0xff]
        %v1185 = vld [vmem:[#allocation11 + $0x40] sm:$0xff]
        %v1186 = vld [vmem:[#allocation11 + $0x48] sm:$0xff]
        %v1187 = vld [vmem:[#allocation11 + $0x50] sm:$0xff]
        %v1188 = vld [vmem:[#allocation11 + $0x58] sm:$0xff]
        %v1189 = vld [vmem:[#allocation11 + $0x60] sm:$0xff]
        %v1190 = vld [vmem:[#allocation11 + $0x68] sm:$0xff]
        %v1191 = vld [vmem:[#allocation11 + $0x70] sm:$0xff]
        %v1192 = vld [vmem:[#allocation11 + $0x78] sm:$0xff]
        %v1193 = vld [vmem:[%s270] sm:$0xf]
        %v1194 = vld [vmem:[%s270 + $0x4] sm:$0xf]
        %v1195 = vld [vmem:[%s270 + $0x8] sm:$0xf]
        %v1196 = vld [vmem:[%s270 + $0xc] sm:$0xf]
        %v1197 = vld [vmem:[%s270 + $0x10] sm:$0xf]
        %v1198 = vld [vmem:[%s270 + $0x14] sm:$0xf]
        %v1199 = vld [vmem:[%s270 + $0x18] sm:$0xf]
        %v1200 = vld [vmem:[%s270 + $0x1c] sm:$0xf]
        %v1201 = vld [vmem:[%s270 + $0x20] sm:$0xf]
        %v1202 = vld [vmem:[%s270 + $0x24] sm:$0xf]
        %v1203 = vld [vmem:[%s270 + $0x28] sm:$0xf]
        %v1204 = vld [vmem:[%s270 + $0x2c] sm:$0xf]
        %v1205 = vld [vmem:[%s270 + $0x30] sm:$0xf]
        %v1206 = vld [vmem:[%s270 + $0x34] sm:$0xf]
        %v1207 = vld [vmem:[%s270 + $0x38] sm:$0xf]
        %v1208 = vld [vmem:[%s270 + $0x3c] sm:$0xf]
        %v1209 = vpack.c.bf16 %v1118, %v1115
        %v1210 = vpack.c.bf16 %v1126, %v1123
        %v1211 = vpack.c.bf16 %v1134, %v1131
        %v1212 = vpack.c.bf16 %v1142, %v1139
        %v1213 = vpack.c.bf16 %v1150, %v1147
        %v1214 = vpack.c.bf16 %v1158, %v1155
        %v1215 = vpack.c.bf16 %v1166, %v1163
        %v1216 = vpack.c.bf16 %v1174, %v1171
        %v1233 = vunpack.c.l.b16 %v1193
        %v1234 = vunpack.c.l.b16 %v1194
        %v1235 = vunpack.c.l.b16 %v1195
        %v1236 = vunpack.c.l.b16 %v1196
        %v1237 = vunpack.c.l.b16 %v1197
        %v1238 = vunpack.c.l.b16 %v1198
        %v1239 = vunpack.c.l.b16 %v1199
        %v1240 = vunpack.c.l.b16 %v1200
        %v1241 = vunpack.c.l.b16 %v1201
        %v1242 = vunpack.c.l.b16 %v1202
        %v1243 = vunpack.c.l.b16 %v1203
        %v1244 = vunpack.c.l.b16 %v1204
        %v1245 = vunpack.c.l.b16 %v1205
        %v1246 = vunpack.c.l.b16 %v1206
        %v1247 = vunpack.c.l.b16 %v1207
        %v1248 = vunpack.c.l.b16 %v1208
        %v1249 = vpack.c.b16 %v1234, %v1233
        %v1250 = vpack.c.b16 %v1236, %v1235
        %v1251 = vpack.c.b16 %v1238, %v1237
        %v1252 = vpack.c.b16 %v1240, %v1239
        %v1253 = vpack.c.b16 %v1242, %v1241
        %v1254 = vpack.c.b16 %v1244, %v1243
        %v1255 = vpack.c.b16 %v1246, %v1245
        %v1256 = vpack.c.b16 %v1248, %v1247
        %1265 = vmatprep.subr.bf16.mxu0 0
        %1266 = vmatpush1.bf16.msra.mxu0 %v1209
        %1267 = vmatprep.subr.bf16.mxu0 0
        %1268 = vmatpush1.bf16.msra.mxu0 %v1210
        %1269 = vmatprep.subr.bf16.mxu0 0
        %1270 = vmatpush1.bf16.msra.mxu0 %v1211
        %1271 = vmatprep.subr.bf16.mxu0 0
        %1272 = vmatpush1.bf16.msra.mxu0 %v1212
        %1273 = vmatprep.subr.bf16.mxu0 0
        %1274 = vmatpush1.bf16.msra.mxu0 %v1213
        %1275 = vmatprep.subr.bf16.mxu0 0
        %1276 = vmatpush1.bf16.msra.mxu0 %v1214
        %1277 = vmatprep.subr.bf16.mxu0 0
        %1278 = vmatpush1.bf16.msra.mxu0 %v1215
        %1279 = vmatprep.subr.bf16.mxu0 0
        %1280 = vmatpush1.bf16.msra.mxu0 %v1216
        %1281 = vmatprep.subr.bf16.mxu0 0
        %1282 = vmatpush1.bf16.msra.mxu0 0
        %1283 = vmatprep.subr.bf16.mxu0 0
        %1284 = vmatpush1.bf16.msra.mxu0 0
        %1285 = vmatprep.subr.bf16.mxu0 0
        %1286 = vmatpush1.bf16.msra.mxu0 0
        %1287 = vmatprep.subr.bf16.mxu0 0
        %1288 = vmatpush1.bf16.msra.mxu0 0
        %1289 = vmatprep.subr.bf16.mxu0 0
        %1290 = vmatpush1.bf16.msra.mxu0 0
        %1291 = vmatprep.subr.bf16.mxu0 0
        %1292 = vmatpush1.bf16.msra.mxu0 0
        %1293 = vmatprep.subr.bf16.mxu0 0
        %1294 = vmatpush1.bf16.msra.mxu0 0
        %1295 = vmatprep.subr.bf16.mxu0 0
        %1296 = vmatpush1.bf16.msra.mxu0 0
        %1297 = vmatprep.mubr.bf16.mxu0 0
        %1298 = vmatmul.mubr.bf16.gmra.mrb[0].mxu0 %v1249
        %v1299 = vpop.f32.mrb[0].mxu0
        %v1300 = vadd.f32 0.0, %v1299
        %v1301 = vpop.f32.mrb[0].mxu0
        %v1302 = vpop.f32.mrb[0].mxu0
        %v1303 = vadd.f32 0.0, %v1302
        %v1304 = vpop.f32.mrb[0].mxu0
        %1305 = vmatprep.mubr.bf16.mxu0 0
        %1306 = vmatmul.mubr.bf16.gmra.mrb[0].mxu0 %v1250
        %v1307 = vpop.f32.mrb[0].mxu0
        %v1308 = vadd.f32 0.0, %v1307
        %v1309 = vpop.f32.mrb[0].mxu0
        %v1310 = vpop.f32.mrb[0].mxu0
        %v1311 = vadd.f32 0.0, %v1310
        %v1312 = vpop.f32.mrb[0].mxu0
        %1313 = vmatprep.mubr.bf16.mxu0 0
        %1314 = vmatmul.mubr.bf16.gmra.mrb[0].mxu0 %v1251
        %v1315 = vpop.f32.mrb[0].mxu0
        %v1316 = vadd.f32 0.0, %v1315
        %v1317 = vpop.f32.mrb[0].mxu0
        %v1318 = vpop.f32.mrb[0].mxu0
        %v1319 = vadd.f32 0.0, %v1318
        %v1320 = vpop.f32.mrb[0].mxu0
        %1321 = vmatprep.mubr.bf16.mxu0 0
        %1322 = vmatmul.mubr.bf16.gmra.mrb[0].mxu0 %v1252
        %v1323 = vpop.f32.mrb[0].mxu0
        %v1324 = vadd.f32 0.0, %v1323
        %v1325 = vpop.f32.mrb[0].mxu0
        %v1326 = vpop.f32.mrb[0].mxu0
        %v1327 = vadd.f32 0.0, %v1326
        %v1328 = vpop.f32.mrb[0].mxu0
        %1329 = vmatprep.mubr.bf16.mxu0 0
        %1330 = vmatmul.mubr.bf16.gmra.mrb[0].mxu0 %v1253
        %v1331 = vpop.f32.mrb[0].mxu0
        %v1332 = vadd.f32 0.0, %v1331
        %v1333 = vpop.f32.mrb[0].mxu0
        %v1334 = vpop.f32.mrb[0].mxu0
        %v1335 = vadd.f32 0.0, %v1334
        %v1336 = vpop.f32.mrb[0].mxu0
        %1337 = vmatprep.mubr.bf16.mxu0 0
        %1338 = vmatmul.mubr.bf16.gmra.mrb[0].mxu0 %v1254
        %v1339 = vpop.f32.mrb[0].mxu0
        %v1340 = vadd.f32 0.0, %v1339
        %v1341 = vpop.f32.mrb[0].mxu0
        %v1342 = vpop.f32.mrb[0].mxu0
        %v1343 = vadd.f32 0.0, %v1342
        %v1344 = vpop.f32.mrb[0].mxu0
        %1345 = vmatprep.mubr.bf16.mxu0 0
        %1346 = vmatmul.mubr.bf16.gmra.mrb[0].mxu0 %v1255
        %v1347 = vpop.f32.mrb[0].mxu0
        %v1348 = vadd.f32 0.0, %v1347
        %v1349 = vpop.f32.mrb[0].mxu0
        %v1350 = vpop.f32.mrb[0].mxu0
        %v1351 = vadd.f32 0.0, %v1350
        %v1352 = vpop.f32.mrb[0].mxu0
        %1353 = vmatprep.mubr.bf16.mxu0 0
        %1354 = vmatmul.mubr.bf16.gmra.mrb[0].mxu0 %v1256
        %v1355 = vpop.f32.mrb[0].mxu0
        %v1356 = vadd.f32 0.0, %v1355
        %v1357 = vpop.f32.mrb[0].mxu0
        %v1358 = vpop.f32.mrb[0].mxu0
        %v1359 = vadd.f32 0.0, %v1358
        %v1360 = vpop.f32.mrb[0].mxu0
        %1361 = vdwg.mxu0
        %v1362 = vadd.f32 %v1177, %v1300
        %v1363 = vadd.f32 %v1178, %v1303
        %v1364 = vadd.f32 %v1179, %v1308
        %v1365 = vadd.f32 %v1180, %v1311
        %v1366 = vadd.f32 %v1181, %v1316
        %v1367 = vadd.f32 %v1182, %v1319
        %v1368 = vadd.f32 %v1183, %v1324
        %v1369 = vadd.f32 %v1184, %v1327
        %v1370 = vadd.f32 %v1185, %v1332
        %v1371 = vadd.f32 %v1186, %v1335
        %v1372 = vadd.f32 %v1187, %v1340
        %v1373 = vadd.f32 %v1188, %v1343
        %v1374 = vadd.f32 %v1189, %v1348
        %v1375 = vadd.f32 %v1190, %v1351
        %v1376 = vadd.f32 %v1191, %v1356
        %v1377 = vadd.f32 %v1192, %v1359
        %1378 = vst [vmem:[#allocation11] sm:$0xff] %v1362
        %1379 = vst [vmem:[#allocation11 + $0x8] sm:$0xff] %v1363
        %1380 = vst [vmem:[#allocation11 + $0x10] sm:$0xff] %v1364
        %1381 = vst [vmem:[#allocation11 + $0x18] sm:$0xff] %v1365
        %1382 = vst [vmem:[#allocation11 + $0x20] sm:$0xff] %v1366
        %1383 = vst [vmem:[#allocation11 + $0x28] sm:$0xff] %v1367
        %1384 = vst [vmem:[#allocation11 + $0x30] sm:$0xff] %v1368
        %1385 = vst [vmem:[#allocation11 + $0x38] sm:$0xff] %v1369
        %1386 = vst [vmem:[#allocation11 + $0x40] sm:$0xff] %v1370
        %1387 = vst [vmem:[#allocation11 + $0x48] sm:$0xff] %v1371
        %1388 = vst [vmem:[#allocation11 + $0x50] sm:$0xff] %v1372
        %1389 = vst [vmem:[#allocation11 + $0x58] sm:$0xff] %v1373
        %1390 = vst [vmem:[#allocation11 + $0x60] sm:$0xff] %v1374
        %1391 = vst [vmem:[#allocation11 + $0x68] sm:$0xff] %v1375
        %1392 = vst [vmem:[#allocation11 + $0x70] sm:$0xff] %v1376
        %1393 = vst [vmem:[#allocation11 + $0x78] sm:$0xff] %v1377
        %p1394 = scmp.eq.s32.totalorder %s23, 3
        // Predicated region
        $region65: #{tpu_custom_call.1} parent=43 // pred_check
          %p1395 = pneg %p1394
        $region66: #{tpu_custom_call.1} parent=43 // pred_check_branch
          %1397 = sbr.rel (%p1395) target = $region68
        $region67: #{tpu_custom_call.1} parent=43 // pred_region
          %v1398 = vld [vmem:[#allocation11] sm:$0xff]
          %v1399 = vld [vmem:[#allocation11 + $0x8] sm:$0xff]
          %v1400 = vld [vmem:[#allocation11 + $0x10] sm:$0xff]
          %v1401 = vld [vmem:[#allocation11 + $0x18] sm:$0xff]
          %v1402 = vld [vmem:[#allocation11 + $0x20] sm:$0xff]
          %v1403 = vld [vmem:[#allocation11 + $0x28] sm:$0xff]
          %v1404 = vld [vmem:[#allocation11 + $0x30] sm:$0xff]
          %v1405 = vld [vmem:[#allocation11 + $0x38] sm:$0xff]
          %v1406 = vld [vmem:[#allocation11 + $0x40] sm:$0xff]
          %v1407 = vld [vmem:[#allocation11 + $0x48] sm:$0xff]
          %v1408 = vld [vmem:[#allocation11 + $0x50] sm:$0xff]
          %v1409 = vld [vmem:[#allocation11 + $0x58] sm:$0xff]
          %v1410 = vld [vmem:[#allocation11 + $0x60] sm:$0xff]
          %v1411 = vld [vmem:[#allocation11 + $0x68] sm:$0xff]
          %v1412 = vld [vmem:[#allocation11 + $0x70] sm:$0xff]
          %v1413 = vld [vmem:[#allocation11 + $0x78] sm:$0xff]
          %v1414 = vld [vmem:[%s5] sm:$0x1]
          %v1416 = vlaneseq
          %v1417 = vshrl.u32 %v1416, 7
          %v1418 = vsub.s32 0, %v1417
          %v1419 = vrot.slane %v1414, %v1418
          %v1421 = vadd.f32 %v1398, %v1419
          %v1422 = vadd.f32 %v1399, %v1419
          %v1423 = vadd.f32 %v1400, %v1419
          %v1424 = vadd.f32 %v1401, %v1419
          %v1425 = vadd.f32 %v1402, %v1419
          %v1426 = vadd.f32 %v1403, %v1419
          %v1427 = vadd.f32 %v1404, %v1419
          %v1428 = vadd.f32 %v1405, %v1419
          %v1429 = vadd.f32 %v1406, %v1419
          %v1430 = vadd.f32 %v1407, %v1419
          %v1431 = vadd.f32 %v1408, %v1419
          %v1432 = vadd.f32 %v1409, %v1419
          %v1433 = vadd.f32 %v1410, %v1419
          %v1434 = vadd.f32 %v1411, %v1419
          %v1435 = vadd.f32 %v1412, %v1419
          %v1436 = vadd.f32 %v1413, %v1419
          %1437 = vst [vmem:[#allocation11] sm:$0xff] %v1421
          %1438 = vst [vmem:[#allocation11 + $0x8] sm:$0xff] %v1422
          %1439 = vst [vmem:[#allocation11 + $0x10] sm:$0xff] %v1423
          %1440 = vst [vmem:[#allocation11 + $0x18] sm:$0xff] %v1424
          %1441 = vst [vmem:[#allocation11 + $0x20] sm:$0xff] %v1425
          %1442 = vst [vmem:[#allocation11 + $0x28] sm:$0xff] %v1426
          %1443 = vst [vmem:[#allocation11 + $0x30] sm:$0xff] %v1427
          %1444 = vst [vmem:[#allocation11 + $0x38] sm:$0xff] %v1428
          %1445 = vst [vmem:[#allocation11 + $0x40] sm:$0xff] %v1429
          %1446 = vst [vmem:[#allocation11 + $0x48] sm:$0xff] %v1430
          %1447 = vst [vmem:[#allocation11 + $0x50] sm:$0xff] %v1431
          %1448 = vst [vmem:[#allocation11 + $0x58] sm:$0xff] %v1432
          %1449 = vst [vmem:[#allocation11 + $0x60] sm:$0xff] %v1433
          %1450 = vst [vmem:[#allocation11 + $0x68] sm:$0xff] %v1434
          %1451 = vst [vmem:[#allocation11 + $0x70] sm:$0xff] %v1435
          %1452 = vst [vmem:[#allocation11 + $0x78] sm:$0xff] %v1436
        $region68: #{tpu_custom_call.1} parent=43 // pred_fallthru
          _
        // Predicated region
        $region69: #{tpu_custom_call.1} parent=43 // pred_check
          %p1453 = pneg %p167
        $region70: #{tpu_custom_call.1} parent=43 // pred_check_branch
          %1455 = sbr.rel (%p1453) target = $region72
        $region71: #{tpu_custom_call.1} parent=43 // pred_region
          %s1457 = ssub.s32 2048, 2048
          %1458 = vsyncadd [#allocation5], %s1457
          %s1459 = sshll.u32 [#allocation11], 4
          %s1460 = int_to_ptr.vmem [resolvable:$true] %s1459
          %1465 = dma.vmem_to_hbm [thread:$0]  %s1460, 2048, %s6, [#allocation5], 128, 128, 8
        $region72: #{tpu_custom_call.1} parent=43 // pred_fallthru
          _
        // Predicated region
        $region73: #{tpu_custom_call.1} parent=43 // pred_check
          %p1466 = pneg %p167
        $region74: #{tpu_custom_call.1} parent=43 // pred_check_branch
          %1468 = sbr.rel (%p1466) target = $region76
        $region75: #{tpu_custom_call.1} parent=43 // pred_region
          %1469 = dma.done [#allocation5], 2048
        $region76: #{tpu_custom_call.1} parent=43 // pred_fallthru
          _
      $region44: #{tpu_custom_call.1} parent=5 // pred_fallthru
        _
      %p1470 = scmp.le.s32.totalorder 2, %s18
      // Predicated region
      $region77: #{tpu_custom_call.1} parent=5 // pred_check
        %p1471 = pneg %p1470
      $region78: #{tpu_custom_call.1} parent=5 // pred_check_branch
        %1473 = sbr.rel (%p1471) target = $region80
      $region79: #{tpu_custom_call.1} parent=5 // pred_region
        %s1474 = ssub.s32 %s18, 2
      $region80: #{tpu_custom_call.1} parent=5 // pred_fallthru
        _
    $region6: #{tpu_custom_call.1} parent=1 // loop_footer
      %s22 = sadd.s32 1, %s18
    $region7: #{tpu_custom_call.1} parent=1 // loop_footer_branch
      %17 = sbr.rel target = $region3
    $region8: #{tpu_custom_call.1} parent=1 // loop_exit
      _
    %1475 = vsyncpa [#allocation4], 1
    %s1476 = scalar_lea.sflag [#allocation4], 1
    %1477 = vsyncpa %s1476, 1
    %1478 = vsyncpa [#allocation7], 1
    %s1479 = scalar_lea.sflag [#allocation7], 1
    %1480 = vsyncpa %s1479, 1
    %1481 = vsyncpa [#allocation10], 1
    %1482 = vsyncpa [#allocation5], 1
    %s1483 = scalar_lea.sflag [#allocation5], 1
    %1484 = vsyncpa %s1483, 1

</llo_original>
